<compile_context>
chip_gen: v6e
topology: v6e:2x2x1
jax: 0.10.0
libtpu: 0.0.40
codegen_flags: <defaults>
</compile_context>

<pallas_src>
import functools

import jax
import jax.numpy as jnp
from jax.experimental import pallas as pl
from jax.experimental.pallas import tpu as pltpu


def _mm(a, b, mm_dtype):
    if mm_dtype is not None:
        a = a.astype(mm_dtype)
        b = b.astype(mm_dtype)
    return jnp.dot(a, b, preferred_element_type=jnp.float32)


def _rel_embedding_kernel(x_ref, relx_ref,
                          wr1_ref, br1_ref, wr2_ref, br2_ref,
                          wm1a_ref, wm1b_ref, bm1_ref,
                          wm2_ref, bm2_ref, wm3_ref, bm3_ref,
                          g_ref, logits_ref, masked_ref,
                          *, inv_temp, n_obj, rel_size, mm_dtype):
    relx = relx_ref[...]                                  # [tb*NN, 3s]
    rows_nn = relx.shape[0]
    n = n_obj
    rows_n = rows_nn // n

    # model_rel: Linear(3s, h2) -> ReLU -> Linear(h2, R+1) (second Linear fused,
    # rel/selector split done with a static lane slice)
    h = jnp.maximum(_mm(relx, wr1_ref[...], mm_dtype) + br1_ref[...], 0.0)
    o = _mm(h, wr2_ref[...], mm_dtype) + br2_ref[...]
    rel_enc = jnp.maximum(o[:, :rel_size], 0.0)           # [tb*NN, R]
    sel_logits = o[:, rel_size:rel_size + 1]              # [tb*NN, 1]

    # selector: round(sigmoid(z/temp)) == (z*inv_temp > 0) for temp>0, finite z.
    # off-diagonal mask: row r is a self-relation iff (r % N^2) % (N+1) == 0
    # (tile start is a multiple of N^2, so the within-tile index suffices).
    r = jax.lax.broadcasted_iota(jnp.int32, (rows_nn, 1), 0)
    offdiag = ((r % (n * n)) % (n + 1)) != 0
    sel = jnp.where(jnp.logical_and(sel_logits * inv_temp > 0.0, offdiag),
                    1.0, 0.0)                             # [tb*NN, 1]

    # sum over senders j: group g = b*N + i owns rows g*N + j.  Write the
    # masked encodings to VMEM scratch and accumulate N strided sublane reads
    # (linear in tile size; no dense aggregation matrix, no extra MXU work).
    masked_ref[...] = rel_enc * sel
    agg = masked_ref[pl.ds(0, rows_n, stride=n), :]
    for j in range(1, n):
        agg = agg + masked_ref[pl.ds(j, rows_n, stride=n), :]   # [tb*N, R]

    # model: Linear(s+R, H) -> ReLU -> Linear(H, H) -> ReLU -> Linear(H, O)
    # (first Linear split into x / rel parts to avoid an in-kernel lane concat)
    z1 = (_mm(x_ref[...], wm1a_ref[...], mm_dtype)
          + _mm(agg, wm1b_ref[...], mm_dtype)
          + bm1_ref[...])
    h1 = jnp.maximum(z1, 0.0)
    h2 = jnp.maximum(_mm(h1, wm2_ref[...], mm_dtype) + bm2_ref[...], 0.0)
    g_ref[...] = _mm(h2, wm3_ref[...], mm_dtype) + bm3_ref[...]
    logits_ref[...] = sel_logits


def _const_spec(shape):
    nd = len(shape)
    return pl.BlockSpec(shape, lambda *args, _nd=nd: (0,) * _nd)


def _tile_bytes(rows, cols, dtype_bytes=4):
    # f32 VMEM tiles are (8, 128)-padded
    return (-(-rows // 8) * 8) * (-(-cols // 128) * 128) * dtype_bytes


def _vmem_estimate(tb, N, s, R, H, h2, O):
    NN = N * N
    rows_n, rows_nn = tb * N, tb * NN
    est = 0
    est += 2 * _tile_bytes(rows_n, s)         # x input (double-buffered)
    est += 2 * _tile_bytes(rows_nn, 3 * s)    # rel_x input
    est += 2 * _tile_bytes(rows_n, O)         # g output
    est += 2 * _tile_bytes(rows_nn, 1)        # sel_logits output
    est += 1 * _tile_bytes(rows_nn, R)        # masked scratch (single buffer)
    # constant weight/bias inputs (tiny, but they are double-buffered too)
    w_shapes = [(3 * s, h2), (1, h2), (h2, R + 1), (1, R + 1), (s, H), (R, H),
                (1, H), (H, H), (1, H), (H, O), (1, O)]
    est += 2 * sum(_tile_bytes(a, b) for a, b in w_shapes)
    return est


def _vmem_budget_bytes():
    # per-generation budget: ~1/3 of physical VMEM, capped so the same tile
    # choice is safe on v7x (64 MiB physical / 32 MiB scoped default)
    try:
        cap = pltpu.get_tpu_info().vmem_capacity_bytes
    except Exception:
        cap = 64 << 20
    return int(min(cap // 3, 24 << 20))


def _pick_batch_tile(BT, N, s, R, H, h2, O, budget, max_rel_rows=4096):
    NN = N * N
    # smallest tb giving sublane-aligned (multiple-of-8) row extents
    base = next(b for b in range(1, 9) if (b * N) % 8 == 0)
    cap = -(-BT // base) * base               # no point exceeding padded BT
    tb = min(base, cap) if cap >= base else base
    t = tb + base
    while (t <= cap and t * NN <= max_rel_rows
           and _vmem_estimate(t, N, s, R, H, h2, O) <= budget):
        tb = t
        t += base
    return tb


def rel_embedding_forward(x, rel_x, params, temp=1.0, batch_tile=None,
                          use_bf16_matmul=False):
    """x: [BT, N, s], rel_x: [BT, N*N, 3*s]  ->  (g, sel, sel_logits)."""
    BT, N, s = x.shape
    _, NN, three_s = rel_x.shape
    assert NN == N * N and three_s == 3 * s
    R = params["wm1b"].shape[0]
    H = params["wm2"].shape[0]
    h2 = params["wr1"].shape[1]
    O = params["wm3"].shape[1]

    budget = _vmem_budget_bytes()
    tb = (batch_tile if batch_tile is not None
          else _pick_batch_tile(BT, N, s, R, H, h2, O, budget))
    assert (tb * N) % 8 == 0, "batch_tile*N must be a multiple of 8"

    # pad the batch to a multiple of the tile (ceil-div grid, tail discarded)
    BT_pad = -(-BT // tb) * tb
    x2d = x.reshape(BT * N, s).astype(jnp.float32)
    relx2d = rel_x.reshape(BT * NN, 3 * s).astype(jnp.float32)
    if BT_pad != BT:
        x2d = jnp.pad(x2d, ((0, (BT_pad - BT) * N), (0, 0)))
        relx2d = jnp.pad(relx2d, ((0, (BT_pad - BT) * NN), (0, 0)))

    weight_names = ("wr1", "br1", "wr2", "br2", "wm1a", "wm1b", "bm1",
                    "wm2", "bm2", "wm3", "bm3")
    weights = tuple(params[k].astype(jnp.float32) for k in weight_names)

    kernel = functools.partial(
        _rel_embedding_kernel, inv_temp=float(1.0 / temp), n_obj=N,
        rel_size=R, mm_dtype=jnp.bfloat16 if use_bf16_matmul else None)

    in_specs = ([pl.BlockSpec((tb * N, s), lambda b: (b, 0)),
                 pl.BlockSpec((tb * NN, 3 * s), lambda b: (b, 0))]
                + [_const_spec(w.shape) for w in weights])
    out_shape = (jax.ShapeDtypeStruct((BT_pad * N, O), jnp.float32),
                 jax.ShapeDtypeStruct((BT_pad * NN, 1), jnp.float32))
    out_specs = (pl.BlockSpec((tb * N, O), lambda b: (b, 0)),
                 pl.BlockSpec((tb * NN, 1), lambda b: (b, 0)))

    est = _vmem_estimate(tb, N, s, R, H, h2, O)
    vmem_limit = int(min(max(est + (8 << 20), 32 << 20), 56 << 20))

    g2d, logits2d = pl.pallas_call(
        kernel,
        out_shape=out_shape,
        grid=(BT_pad // tb,),
        in_specs=in_specs,
        out_specs=out_specs,
        scratch_shapes=[pltpu.VMEM((tb * NN, R), jnp.float32)],
        compiler_params=pltpu.CompilerParams(
            dimension_semantics=("parallel",),   # shards batch over 2 TCs on v7x
            vmem_limit_bytes=vmem_limit),
    )(x2d, relx2d, *weights)

    g = g2d[:BT * N].reshape(BT, N, O)
    sel_logits = logits2d[:BT * NN].reshape(BT, NN, 1)
    # selector recomputed wrapper-side: one fused elementwise pass, static mask
    offdiag = (1.0 - jnp.eye(N, dtype=jnp.float32)).reshape(1, NN, 1)
    sel = jnp.where(sel_logits * (1.0 / temp) > 0.0, 1.0, 0.0) * offdiag
    # TODO(synk): collision_margin != None path (get_rel_states_mask) and
    # SN=True (SpectralNorm) path are not implemented (default path only).
    return g, sel, sel_logits


def init_params(key, s, rel_size, hidden_size, output_size):
    """Xavier-normal weights, zero biases (matches the PyTorch __init__)."""
    def xavier(k, fan_in, fan_out):
        std = (2.0 / (fan_in + fan_out)) ** 0.5
        return std * jax.random.normal(k, (fan_in, fan_out), jnp.float32)

    ks = jax.random.split(key, 5)
    h2 = hidden_size // 2
    wm1 = xavier(ks[2], s + rel_size, hidden_size)
    return {
        "wr1": xavier(ks[0], 3 * s, h2),
        "br1": jnp.zeros((1, h2), jnp.float32),
        "wr2": xavier(ks[1], h2, rel_size + 1),
        "br2": jnp.zeros((1, rel_size + 1), jnp.float32),
        "wm1a": wm1[:s, :], "wm1b": wm1[s:, :],
        "bm1": jnp.zeros((1, hidden_size), jnp.float32),
        "wm2": xavier(ks[3], hidden_size, hidden_size),
        "bm2": jnp.zeros((1, hidden_size), jnp.float32),
        "wm3": xavier(ks[4], hidden_size, output_size),
        "bm3": jnp.zeros((1, output_size), jnp.float32),
    }


def ref_forward(x, rel_x, params, temp=1.0):
    """Pure-JAX reference mirroring the PyTorch forward (collision_margin=None)."""
    BT, N, s = x.shape
    NN = N * N
    wm1 = jnp.concatenate([params["wm1a"], params["wm1b"]], axis=0)

    h = jax.nn.relu(rel_x @ params["wr1"] + params["br1"])
    o = h @ params["wr2"] + params["br2"]
    rel_enc = jax.nn.relu(o[..., :-1])
    sel_logits = o[..., -1:]
    sel = jnp.round(jax.nn.sigmoid(sel_logits / temp))
    mask_I = (1.0 - jnp.eye(N)).reshape(1, NN, 1)
    sel = sel * mask_I
    rel_agg = (rel_enc * sel).reshape(BT, N, N, -1).sum(2)
    z = jnp.concatenate([x, rel_agg], axis=-1)
    h1 = jax.nn.relu(z @ wm1 + params["bm1"])
    h2 = jax.nn.relu(h1 @ params["wm2"] + params["bm2"])
    g = h2 @ params["wm3"] + params["bm3"]
    return g, sel, sel_logits


if __name__ == "__main__":
    # small, module-consistent shapes; BT=6 with batch_tile=4 exercises a
    # 2-step grid plus the padded-tail path; default tile exercises auto-sizing
    s, rel_size, hidden_size, output_size = 8, 16, 32, 16
    BT, N = 6, 4
    NN = N * N

    key = jax.random.PRNGKey(0)
    kx, kr, kp = jax.random.split(key, 3)
    x = jax.random.normal(kx, (BT, N, s), jnp.float32)
    rel_x = jax.random.normal(kr, (BT, NN, 3 * s), jnp.float32)
    params = init_params(kp, s, rel_size, hidden_size, output_size)

    g_ref, sel_ref, logits_ref = ref_forward(x, rel_x, params, temp=1.0)

    # auto-sized batch tile (single grid step at this tiny BT)
    g, sel, sel_logits = rel_embedding_forward(x, rel_x, params, temp=1.0)
    jax.block_until_ready((g, sel, sel_logits))
    assert jnp.allclose(g, g_ref, rtol=1e-4, atol=1e-4)
    assert jnp.allclose(sel, sel_ref, rtol=1e-4, atol=1e-4)
    assert jnp.allclose(sel_logits, logits_ref, rtol=1e-4, atol=1e-4)

    # explicit tile -> 2 grid steps + padded tail
    g2, sel2, logits2 = rel_embedding_forward(x, rel_x, params, temp=1.0,
                                              batch_tile=4)
    jax.block_until_ready((g2, sel2, logits2))
    assert jnp.allclose(g2, g_ref, rtol=1e-4, atol=1e-4)
    assert jnp.allclose(sel2, sel_ref, rtol=1e-4, atol=1e-4)
    assert jnp.allclose(logits2, logits_ref, rtol=1e-4, atol=1e-4)

    print("KERNEL_OK")
</pallas_src>

<mosaic_0001>
module attributes {stable_mosaic.version = 11 : i64} {
  func.func @_rel_embedding_kernel(%arg0: i32, %arg1: memref<24x8xf32, #tpu.memory_space<vmem>>, %arg2: memref<96x24xf32, #tpu.memory_space<vmem>>, %arg3: memref<24x16xf32, #tpu.memory_space<vmem>>, %arg4: memref<1x16xf32, #tpu.memory_space<vmem>>, %arg5: memref<16x17xf32, #tpu.memory_space<vmem>>, %arg6: memref<1x17xf32, #tpu.memory_space<vmem>>, %arg7: memref<8x32xf32, #tpu.memory_space<vmem>>, %arg8: memref<16x32xf32, #tpu.memory_space<vmem>>, %arg9: memref<1x32xf32, #tpu.memory_space<vmem>>, %arg10: memref<32x32xf32, #tpu.memory_space<vmem>>, %arg11: memref<1x32xf32, #tpu.memory_space<vmem>>, %arg12: memref<32x16xf32, #tpu.memory_space<vmem>>, %arg13: memref<1x16xf32, #tpu.memory_space<vmem>>, %arg14: memref<24x16xf32, #tpu.memory_space<vmem>>, %arg15: memref<96x1xf32, #tpu.memory_space<vmem>>, %arg16: memref<96x16xf32, #tpu.memory_space<vmem>>) attributes {dimension_semantics = [#tpu.dimension_semantics<parallel>], iteration_bounds = array<i64: 1>, scalar_prefetch = 0 : i64, scratch_operands = 1 : i64, tpu.core_type = #tpu.core_type<tc>, window_params = [{transform_indices = @transform_0, window_bounds = array<i64: 24, 8>}, {transform_indices = @transform_1, window_bounds = array<i64: 96, 24>}, {pipeline_mode = #tpu.pipeline_mode<synchronous>, transform_indices = @transform_2, window_bounds = array<i64: 24, 16>}, {pipeline_mode = #tpu.pipeline_mode<synchronous>, transform_indices = @transform_3, window_bounds = array<i64: 1, 16>}, {pipeline_mode = #tpu.pipeline_mode<synchronous>, transform_indices = @transform_4, window_bounds = array<i64: 16, 17>}, {pipeline_mode = #tpu.pipeline_mode<synchronous>, transform_indices = @transform_5, window_bounds = array<i64: 1, 17>}, {pipeline_mode = #tpu.pipeline_mode<synchronous>, transform_indices = @transform_6, window_bounds = array<i64: 8, 32>}, {pipeline_mode = #tpu.pipeline_mode<synchronous>, transform_indices = @transform_7, window_bounds = array<i64: 16, 32>}, {pipeline_mode = #tpu.pipeline_mode<synchronous>, transform_indices = @transform_8, window_bounds = array<i64: 1, 32>}, {pipeline_mode = #tpu.pipeline_mode<synchronous>, transform_indices = @transform_9, window_bounds = array<i64: 32, 32>}, {pipeline_mode = #tpu.pipeline_mode<synchronous>, transform_indices = @transform_10, window_bounds = array<i64: 1, 32>}, {pipeline_mode = #tpu.pipeline_mode<synchronous>, transform_indices = @transform_11, window_bounds = array<i64: 32, 16>}, {pipeline_mode = #tpu.pipeline_mode<synchronous>, transform_indices = @transform_12, window_bounds = array<i64: 1, 16>}, {transform_indices = @transform_13, window_bounds = array<i64: 24, 16>}, {transform_indices = @transform_14, window_bounds = array<i64: 96, 1>}]} {
    %c0 = arith.constant 0 : index
    %c0_0 = arith.constant 0 : index
    %0 = vector.load %arg2[%c0, %c0_0] : memref<96x24xf32, #tpu.memory_space<vmem>>, vector<96x24xf32>
    %c0_1 = arith.constant 0 : index
    %c0_2 = arith.constant 0 : index
    %1 = vector.load %arg3[%c0_1, %c0_2] : memref<24x16xf32, #tpu.memory_space<vmem>>, vector<24x16xf32>
    %cst = arith.constant dense<0.000000e+00> : vector<96x16xf32>
    %2 = tpu.matmul %0, %1, %cst {dimension_numbers = #tpu.dot_dimension_numbers<[1], [0], [0], [1], [0, 0, 1, 1], [], []>} : vector<96x24xf32>, vector<24x16xf32>, vector<96x16xf32> -> vector<96x16xf32>
    %c0_3 = arith.constant 0 : index
    %c0_4 = arith.constant 0 : index
    %3 = vector.load %arg4[%c0_3, %c0_4] : memref<1x16xf32, #tpu.memory_space<vmem>>, vector<1x16xf32>
    %4 = vector.broadcast %3 : vector<1x16xf32> to vector<96x16xf32>
    %5 = arith.addf %2, %4 : vector<96x16xf32>
    %cst_5 = arith.constant 0.000000e+00 : f32
    %6 = vector.broadcast %cst_5 : f32 to vector<96x16xf32>
    %7 = arith.maximumf %5, %6 : vector<96x16xf32>
    %c0_6 = arith.constant 0 : index
    %c0_7 = arith.constant 0 : index
    %8 = vector.load %arg5[%c0_6, %c0_7] : memref<16x17xf32, #tpu.memory_space<vmem>>, vector<16x17xf32>
    %cst_8 = arith.constant dense<0.000000e+00> : vector<96x17xf32>
    %9 = tpu.matmul %7, %8, %cst_8 {dimension_numbers = #tpu.dot_dimension_numbers<[1], [0], [0], [1], [0, 0, 1, 1], [], []>} : vector<96x16xf32>, vector<16x17xf32>, vector<96x17xf32> -> vector<96x17xf32>
    %c0_9 = arith.constant 0 : index
    %c0_10 = arith.constant 0 : index
    %10 = vector.load %arg6[%c0_9, %c0_10] : memref<1x17xf32, #tpu.memory_space<vmem>>, vector<1x17xf32>
    %11 = vector.broadcast %10 : vector<1x17xf32> to vector<96x17xf32>
    %12 = arith.addf %9, %11 : vector<96x17xf32>
    %13 = vector.extract_strided_slice %12 {offsets = [0, 0], sizes = [96, 16], strides = [1, 1]} : vector<96x17xf32> to vector<96x16xf32>
    %cst_11 = arith.constant 0.000000e+00 : f32
    %14 = vector.broadcast %cst_11 : f32 to vector<96x16xf32>
    %15 = arith.maximumf %13, %14 : vector<96x16xf32>
    %16 = vector.extract_strided_slice %12 {offsets = [0, 16], sizes = [96, 1], strides = [1, 1]} : vector<96x17xf32> to vector<96x1xf32>
    %17 = tpu.iota {dimensions = array<i32: 0>} : vector<96x1xi32>
    %c16_i32 = arith.constant 16 : i32
    %c0_i32 = arith.constant 0 : i32
    %18 = arith.cmpi eq, %c16_i32, %c0_i32 : i32
    %c1_i32 = arith.constant 1 : i32
    %19 = arith.select %18, %c1_i32, %c16_i32 : i32
    %20 = vector.broadcast %19 : i32 to vector<96x1xi32>
    %21 = arith.remsi %17, %20 : vector<96x1xi32>
    %c0_i32_12 = arith.constant 0 : i32
    %22 = vector.broadcast %c0_i32_12 : i32 to vector<96x1xi32>
    %23 = arith.cmpi ne, %21, %22 : vector<96x1xi32>
    %c0_i32_13 = arith.constant 0 : i32
    %24 = vector.broadcast %c0_i32_13 : i32 to vector<96x1xi32>
    %25 = arith.cmpi slt, %21, %24 : vector<96x1xi32>
    %c0_i32_14 = arith.constant 0 : i32
    %26 = arith.cmpi slt, %19, %c0_i32_14 : i32
    %27 = vector.broadcast %26 : i1 to vector<96x1xi1>
    %28 = vector.broadcast %27 : vector<96x1xi1> to vector<96x1xi1>
    %29 = arith.xori %25, %28 : vector<96x1xi1>
    %30 = arith.andi %29, %23 : vector<96x1xi1>
    %31 = vector.broadcast %19 : i32 to vector<96x1xi32>
    %32 = arith.addi %21, %31 : vector<96x1xi32>
    %33 = arith.select %30, %32, %21 : vector<96x1xi1>, vector<96x1xi32>
    %c5_i32 = arith.constant 5 : i32
    %c0_i32_15 = arith.constant 0 : i32
    %34 = arith.cmpi eq, %c5_i32, %c0_i32_15 : i32
    %c1_i32_16 = arith.constant 1 : i32
    %35 = arith.select %34, %c1_i32_16, %c5_i32 : i32
    %36 = vector.broadcast %35 : i32 to vector<96x1xi32>
    %37 = arith.remsi %33, %36 : vector<96x1xi32>
    %c0_i32_17 = arith.constant 0 : i32
    %38 = vector.broadcast %c0_i32_17 : i32 to vector<96x1xi32>
    %39 = arith.cmpi ne, %37, %38 : vector<96x1xi32>
    %c0_i32_18 = arith.constant 0 : i32
    %40 = vector.broadcast %c0_i32_18 : i32 to vector<96x1xi32>
    %41 = arith.cmpi slt, %37, %40 : vector<96x1xi32>
    %c0_i32_19 = arith.constant 0 : i32
    %42 = arith.cmpi slt, %35, %c0_i32_19 : i32
    %43 = vector.broadcast %42 : i1 to vector<96x1xi1>
    %44 = vector.broadcast %43 : vector<96x1xi1> to vector<96x1xi1>
    %45 = arith.xori %41, %44 : vector<96x1xi1>
    %46 = arith.andi %45, %39 : vector<96x1xi1>
    %47 = vector.broadcast %35 : i32 to vector<96x1xi32>
    %48 = arith.addi %37, %47 : vector<96x1xi32>
    %49 = arith.select %46, %48, %37 : vector<96x1xi1>, vector<96x1xi32>
    %c0_i32_20 = arith.constant 0 : i32
    %50 = vector.broadcast %c0_i32_20 : i32 to vector<96x1xi32>
    %51 = arith.cmpi ne, %49, %50 : vector<96x1xi32>
    %cst_21 = arith.constant 1.000000e+00 : f32
    %52 = vector.broadcast %cst_21 : f32 to vector<96x1xf32>
    %53 = arith.mulf %16, %52 : vector<96x1xf32>
    %cst_22 = arith.constant 0.000000e+00 : f32
    %54 = vector.broadcast %cst_22 : f32 to vector<96x1xf32>
    %55 = arith.cmpf ogt, %53, %54 : vector<96x1xf32>
    %56 = arith.andi %55, %51 : vector<96x1xi1>
    %cst_23 = arith.constant 1.000000e+00 : f32
    %cst_24 = arith.constant 0.000000e+00 : f32
    %57 = vector.broadcast %cst_23 : f32 to vector<96x1xf32>
    %58 = vector.broadcast %cst_24 : f32 to vector<96x1xf32>
    %59 = arith.select %56, %57, %58 : vector<96x1xi1>, vector<96x1xf32>
    %60 = vector.broadcast %59 : vector<96x1xf32> to vector<96x16xf32>
    %61 = arith.mulf %15, %60 : vector<96x16xf32>
    %c0_25 = arith.constant 0 : index
    %c0_26 = arith.constant 0 : index
    %62 = vector.load %arg16[%c0_25, %c0_26] : memref<96x16xf32, #tpu.memory_space<vmem>>, vector<96x16xf32>
    tpu.vector_store %arg16[%c0_25, %c0_26], %61 {strides = array<i32>} : memref<96x16xf32, #tpu.memory_space<vmem>>, vector<96x16xf32>,
    %c0_27 = arith.constant 0 : index
    %c0_28 = arith.constant 0 : index
    %63 = tpu.strided_load %arg16[%c0_27, %c0_28] {strides = array<i32: 4, 1>} : memref<96x16xf32, #tpu.memory_space<vmem>>, vector<24x16xf32>
    %c1 = arith.constant 1 : index
    %c0_29 = arith.constant 0 : index
    %64 = tpu.strided_load %arg16[%c1, %c0_29] {strides = array<i32: 4, 1>} : memref<96x16xf32, #tpu.memory_space<vmem>>, vector<24x16xf32>
    %65 = arith.addf %63, %64 : vector<24x16xf32>
    %c2 = arith.constant 2 : index
    %c0_30 = arith.constant 0 : index
    %66 = tpu.strided_load %arg16[%c2, %c0_30] {strides = array<i32: 4, 1>} : memref<96x16xf32, #tpu.memory_space<vmem>>, vector<24x16xf32>
    %67 = arith.addf %65, %66 : vector<24x16xf32>
    %c3 = arith.constant 3 : index
    %c0_31 = arith.constant 0 : index
    %68 = tpu.strided_load %arg16[%c3, %c0_31] {strides = array<i32: 4, 1>} : memref<96x16xf32, #tpu.memory_space<vmem>>, vector<24x16xf32>
    %69 = arith.addf %67, %68 : vector<24x16xf32>
    %c0_32 = arith.constant 0 : index
    %c0_33 = arith.constant 0 : index
    %70 = vector.load %arg1[%c0_32, %c0_33] : memref<24x8xf32, #tpu.memory_space<vmem>>, vector<24x8xf32>
    %c0_34 = arith.constant 0 : index
    %c0_35 = arith.constant 0 : index
    %71 = vector.load %arg7[%c0_34, %c0_35] : memref<8x32xf32, #tpu.memory_space<vmem>>, vector<8x32xf32>
    %cst_36 = arith.constant dense<0.000000e+00> : vector<24x32xf32>
    %72 = tpu.matmul %70, %71, %cst_36 {dimension_numbers = #tpu.dot_dimension_numbers<[1], [0], [0], [1], [0, 0, 1, 1], [], []>} : vector<24x8xf32>, vector<8x32xf32>, vector<24x32xf32> -> vector<24x32xf32>
    %c0_37 = arith.constant 0 : index
    %c0_38 = arith.constant 0 : index
    %73 = vector.load %arg8[%c0_37, %c0_38] : memref<16x32xf32, #tpu.memory_space<vmem>>, vector<16x32xf32>
    %cst_39 = arith.constant dense<0.000000e+00> : vector<24x32xf32>
    %74 = tpu.matmul %69, %73, %cst_39 {dimension_numbers = #tpu.dot_dimension_numbers<[1], [0], [0], [1], [0, 0, 1, 1], [], []>} : vector<24x16xf32>, vector<16x32xf32>, vector<24x32xf32> -> vector<24x32xf32>
    %75 = arith.addf %72, %74 : vector<24x32xf32>
    %c0_40 = arith.constant 0 : index
    %c0_41 = arith.constant 0 : index
    %76 = vector.load %arg9[%c0_40, %c0_41] : memref<1x32xf32, #tpu.memory_space<vmem>>, vector<1x32xf32>
    %77 = vector.broadcast %76 : vector<1x32xf32> to vector<24x32xf32>
    %78 = arith.addf %75, %77 : vector<24x32xf32>
    %cst_42 = arith.constant 0.000000e+00 : f32
    %79 = vector.broadcast %cst_42 : f32 to vector<24x32xf32>
    %80 = arith.maximumf %78, %79 : vector<24x32xf32>
    %c0_43 = arith.constant 0 : index
    %c0_44 = arith.constant 0 : index
    %81 = vector.load %arg10[%c0_43, %c0_44] : memref<32x32xf32, #tpu.memory_space<vmem>>, vector<32x32xf32>
    %cst_45 = arith.constant dense<0.000000e+00> : vector<24x32xf32>
    %82 = tpu.matmul %80, %81, %cst_45 {dimension_numbers = #tpu.dot_dimension_numbers<[1], [0], [0], [1], [0, 0, 1, 1], [], []>} : vector<24x32xf32>, vector<32x32xf32>, vector<24x32xf32> -> vector<24x32xf32>
    %c0_46 = arith.constant 0 : index
    %c0_47 = arith.constant 0 : index
    %83 = vector.load %arg11[%c0_46, %c0_47] : memref<1x32xf32, #tpu.memory_space<vmem>>, vector<1x32xf32>
    %84 = vector.broadcast %83 : vector<1x32xf32> to vector<24x32xf32>
    %85 = arith.addf %82, %84 : vector<24x32xf32>
    %cst_48 = arith.constant 0.000000e+00 : f32
    %86 = vector.broadcast %cst_48 : f32 to vector<24x32xf32>
    %87 = arith.maximumf %85, %86 : vector<24x32xf32>
    %c0_49 = arith.constant 0 : index
    %c0_50 = arith.constant 0 : index
    %88 = vector.load %arg12[%c0_49, %c0_50] : memref<32x16xf32, #tpu.memory_space<vmem>>, vector<32x16xf32>
    %cst_51 = arith.constant dense<0.000000e+00> : vector<24x16xf32>
    %89 = tpu.matmul %87, %88, %cst_51 {dimension_numbers = #tpu.dot_dimension_numbers<[1], [0], [0], [1], [0, 0, 1, 1], [], []>} : vector<24x32xf32>, vector<32x16xf32>, vector<24x16xf32> -> vector<24x16xf32>
    %c0_52 = arith.constant 0 : index
    %c0_53 = arith.constant 0 : index
    %90 = vector.load %arg13[%c0_52, %c0_53] : memref<1x16xf32, #tpu.memory_space<vmem>>, vector<1x16xf32>
    %91 = vector.broadcast %90 : vector<1x16xf32> to vector<24x16xf32>
    %92 = arith.addf %89, %91 : vector<24x16xf32>
    %c0_54 = arith.constant 0 : index
    %c0_55 = arith.constant 0 : index
    %93 = vector.load %arg14[%c0_54, %c0_55] : memref<24x16xf32, #tpu.memory_space<vmem>>, vector<24x16xf32>
    tpu.vector_store %arg14[%c0_54, %c0_55], %92 {strides = array<i32>} : memref<24x16xf32, #tpu.memory_space<vmem>>, vector<24x16xf32>,
    %c0_56 = arith.constant 0 : index
    %c0_57 = arith.constant 0 : index
    %94 = vector.load %arg15[%c0_56, %c0_57] : memref<96x1xf32, #tpu.memory_space<vmem>>, vector<96x1xf32>
    tpu.vector_store %arg15[%c0_56, %c0_57], %16 {strides = array<i32>} : memref<96x1xf32, #tpu.memory_space<vmem>>, vector<96x1xf32>,
    return
  }
  func.func @transform_0(%arg0: i32) -> (i32, i32) {
    %c0_i32 = arith.constant 0 : i32
    %c0_i32_0 = arith.constant 0 : i32
    return %arg0, %c0_i32 : i32, i32
  }
  func.func @transform_1(%arg0: i32) -> (i32, i32) {
    %c0_i32 = arith.constant 0 : i32
    %c0_i32_0 = arith.constant 0 : i32
    return %arg0, %c0_i32 : i32, i32
  }
  func.func @transform_2(%arg0: i32) -> (i32, i32) {
    %c0_i32 = arith.constant 0 : i32
    %c0_i32_0 = arith.constant 0 : i32
    %c0_i32_1 = arith.constant 0 : i32
    return %c0_i32, %c0_i32_0 : i32, i32
  }
  func.func @transform_3(%arg0: i32) -> (i32, i32) {
    %c0_i32 = arith.constant 0 : i32
    %c0_i32_0 = arith.constant 0 : i32
    %c0_i32_1 = arith.constant 0 : i32
    return %c0_i32, %c0_i32_0 : i32, i32
  }
  func.func @transform_4(%arg0: i32) -> (i32, i32) {
    %c0_i32 = arith.constant 0 : i32
    %c0_i32_0 = arith.constant 0 : i32
    %c0_i32_1 = arith.constant 0 : i32
    return %c0_i32, %c0_i32_0 : i32, i32
  }
  func.func @transform_5(%arg0: i32) -> (i32, i32) {
    %c0_i32 = arith.constant 0 : i32
    %c0_i32_0 = arith.constant 0 : i32
    %c0_i32_1 = arith.constant 0 : i32
    return %c0_i32, %c0_i32_0 : i32, i32
  }
  func.func @transform_6(%arg0: i32) -> (i32, i32) {
    %c0_i32 = arith.constant 0 : i32
    %c0_i32_0 = arith.constant 0 : i32
    %c0_i32_1 = arith.constant 0 : i32
    return %c0_i32, %c0_i32_0 : i32, i32
  }
  func.func @transform_7(%arg0: i32) -> (i32, i32) {
    %c0_i32 = arith.constant 0 : i32
    %c0_i32_0 = arith.constant 0 : i32
    %c0_i32_1 = arith.constant 0 : i32
    return %c0_i32, %c0_i32_0 : i32, i32
  }
  func.func @transform_8(%arg0: i32) -> (i32, i32) {
    %c0_i32 = arith.constant 0 : i32
    %c0_i32_0 = arith.constant 0 : i32
    %c0_i32_1 = arith.constant 0 : i32
    return %c0_i32, %c0_i32_0 : i32, i32
  }
  func.func @transform_9(%arg0: i32) -> (i32, i32) {
    %c0_i32 = arith.constant 0 : i32
    %c0_i32_0 = arith.constant 0 : i32
    %c0_i32_1 = arith.constant 0 : i32
    return %c0_i32, %c0_i32_0 : i32, i32
  }
  func.func @transform_10(%arg0: i32) -> (i32, i32) {
    %c0_i32 = arith.constant 0 : i32
    %c0_i32_0 = arith.constant 0 : i32
    %c0_i32_1 = arith.constant 0 : i32
    return %c0_i32, %c0_i32_0 : i32, i32
  }
  func.func @transform_11(%arg0: i32) -> (i32, i32) {
    %c0_i32 = arith.constant 0 : i32
    %c0_i32_0 = arith.constant 0 : i32
    %c0_i32_1 = arith.constant 0 : i32
    return %c0_i32, %c0_i32_0 : i32, i32
  }
  func.func @transform_12(%arg0: i32) -> (i32, i32) {
    %c0_i32 = arith.constant 0 : i32
    %c0_i32_0 = arith.constant 0 : i32
    %c0_i32_1 = arith.constant 0 : i32
    return %c0_i32, %c0_i32_0 : i32, i32
  }
  func.func @transform_13(%arg0: i32) -> (i32, i32) {
    %c0_i32 = arith.constant 0 : i32
    %c0_i32_0 = arith.constant 0 : i32
    return %arg0, %c0_i32 : i32, i32
  }
  func.func @transform_14(%arg0: i32) -> (i32, i32) {
    %c0_i32 = arith.constant 0 : i32
    %c0_i32_0 = arith.constant 0 : i32
    return %arg0, %c0_i32 : i32, i32
  }
}

</mosaic_0001>

<llo_original>
// kernel: tpu_custom_call.1
$region0: #{tpu_custom_call.1}
  #allocation0 [shape = 'u32[]', space=smem, size = 0x4, offset = 0x4, fixed_abs, tag = 'smem constant byte address 0x4 - core index']
  #allocation1 [shape = 'u32[144,128]{1,0:T(1,128)}', space=vmem, size = 0x12000, scoped, tag = 'internal scratch']
  #allocation2 [shape = 'f32[96,16]{1,0:T(8,128)}', space=vmem, size = 0xc000, scoped, tag = 'scratch operand']
  %s0 = inlined_call_operand.vmem [shape: f32[24,8], index: 0, kind: input, shape index: {}]
  %s1 = inlined_call_operand.vmem [shape: f32[96,24], index: 1, kind: input, shape index: {}]
  %s2 = inlined_call_operand.vmem [shape: f32[24,16], index: 2, kind: input, shape index: {}]
  %s3 = inlined_call_operand.vmem [shape: f32[1,16], index: 3, kind: input, shape index: {}]
  %s4 = inlined_call_operand.vmem [shape: f32[16,17], index: 4, kind: input, shape index: {}]
  %s5 = inlined_call_operand.vmem [shape: f32[1,17], index: 5, kind: input, shape index: {}]
  %s6 = inlined_call_operand.vmem [shape: f32[8,32], index: 6, kind: input, shape index: {}]
  %s7 = inlined_call_operand.vmem [shape: f32[16,32], index: 7, kind: input, shape index: {}]
  %s8 = inlined_call_operand.vmem [shape: f32[1,32], index: 8, kind: input, shape index: {}]
  %s9 = inlined_call_operand.vmem [shape: f32[32,32], index: 9, kind: input, shape index: {}]
  %s10 = inlined_call_operand.vmem [shape: f32[1,32], index: 10, kind: input, shape index: {}]
  %s11 = inlined_call_operand.vmem [shape: f32[32,16], index: 11, kind: input, shape index: {}]
  %s12 = inlined_call_operand.vmem [shape: f32[1,16], index: 12, kind: input, shape index: {}]
  %s13 = inlined_call_operand.vmem [shape: f32[24,16], index: 13, kind: output, shape index: {0}]
  %s14 = inlined_call_operand.vmem [shape: f32[96,1], index: 14, kind: output, shape index: {1}]
  %15 = xla_tuple %s13, %s14
  %s16 = sld [smem:[#allocation0]]
  $region70: #{tpu_custom_call.1} parent=0
    _
  %s18 = ssub.s32 1, %s16
  %s19 = scalar_select 0, %s18, %s16
  // Predicated region
  $region2: #{tpu_custom_call.1} parent=0 // pred_check
    _
  $region3: #{tpu_custom_call.1} parent=0 // pred_check_branch
    %21 = sbr.rel (0) target = $region5
  $region4: #{tpu_custom_call.1} parent=0 // pred_region
    _
  $region5: #{tpu_custom_call.1} parent=0 // pred_fallthru
    _
  // Predicated region
  $region6: #{tpu_custom_call.1} parent=0 // pred_check
    _
  $region7: #{tpu_custom_call.1} parent=0 // pred_check_branch
    %23 = sbr.rel (0) target = $region9
  $region8: #{tpu_custom_call.1} parent=0 // pred_region
    _
  $region9: #{tpu_custom_call.1} parent=0 // pred_fallthru
    _
  // Predicated region
  $region10: #{tpu_custom_call.1} parent=0 // pred_check
    _
  $region11: #{tpu_custom_call.1} parent=0 // pred_check_branch
    %25 = sbr.rel (0) target = $region13
  $region12: #{tpu_custom_call.1} parent=0 // pred_region
    _
  $region13: #{tpu_custom_call.1} parent=0 // pred_fallthru
    _
  // Predicated region
  $region14: #{tpu_custom_call.1} parent=0 // pred_check
    _
  $region15: #{tpu_custom_call.1} parent=0 // pred_check_branch
    %27 = sbr.rel (0) target = $region17
  $region16: #{tpu_custom_call.1} parent=0 // pred_region
    _
  $region17: #{tpu_custom_call.1} parent=0 // pred_fallthru
    _
  // Predicated region
  $region18: #{tpu_custom_call.1} parent=0 // pred_check
    _
  $region19: #{tpu_custom_call.1} parent=0 // pred_check_branch
    %29 = sbr.rel (0) target = $region21
  $region20: #{tpu_custom_call.1} parent=0 // pred_region
    _
  $region21: #{tpu_custom_call.1} parent=0 // pred_fallthru
    _
  // Predicated region
  $region22: #{tpu_custom_call.1} parent=0 // pred_check
    _
  $region23: #{tpu_custom_call.1} parent=0 // pred_check_branch
    %31 = sbr.rel (0) target = $region25
  $region24: #{tpu_custom_call.1} parent=0 // pred_region
    _
  $region25: #{tpu_custom_call.1} parent=0 // pred_fallthru
    _
  // Predicated region
  $region26: #{tpu_custom_call.1} parent=0 // pred_check
    _
  $region27: #{tpu_custom_call.1} parent=0 // pred_check_branch
    %33 = sbr.rel (0) target = $region29
  $region28: #{tpu_custom_call.1} parent=0 // pred_region
    _
  $region29: #{tpu_custom_call.1} parent=0 // pred_fallthru
    _
  // Predicated region
  $region30: #{tpu_custom_call.1} parent=0 // pred_check
    _
  $region31: #{tpu_custom_call.1} parent=0 // pred_check_branch
    %35 = sbr.rel (0) target = $region33
  $region32: #{tpu_custom_call.1} parent=0 // pred_region
    _
  $region33: #{tpu_custom_call.1} parent=0 // pred_fallthru
    _
  // Predicated region
  $region34: #{tpu_custom_call.1} parent=0 // pred_check
    _
  $region35: #{tpu_custom_call.1} parent=0 // pred_check_branch
    %37 = sbr.rel (0) target = $region37
  $region36: #{tpu_custom_call.1} parent=0 // pred_region
    _
  $region37: #{tpu_custom_call.1} parent=0 // pred_fallthru
    _
  // Predicated region
  $region38: #{tpu_custom_call.1} parent=0 // pred_check
    _
  $region39: #{tpu_custom_call.1} parent=0 // pred_check_branch
    %39 = sbr.rel (0) target = $region41
  $region40: #{tpu_custom_call.1} parent=0 // pred_region
    _
  $region41: #{tpu_custom_call.1} parent=0 // pred_fallthru
    _
  // Predicated region
  $region42: #{tpu_custom_call.1} parent=0 // pred_check
    _
  $region43: #{tpu_custom_call.1} parent=0 // pred_check_branch
    %41 = sbr.rel (0) target = $region45
  $region44: #{tpu_custom_call.1} parent=0 // pred_region
    _
  $region45: #{tpu_custom_call.1} parent=0 // pred_fallthru
    _
  // Predicated region
  $region46: #{tpu_custom_call.1} parent=0 // pred_check
    _
  $region47: #{tpu_custom_call.1} parent=0 // pred_check_branch
    %43 = sbr.rel (0) target = $region49
  $region48: #{tpu_custom_call.1} parent=0 // pred_region
    _
  $region49: #{tpu_custom_call.1} parent=0 // pred_fallthru
    _
  // Predicated region
  $region50: #{tpu_custom_call.1} parent=0 // pred_check
    _
  $region51: #{tpu_custom_call.1} parent=0 // pred_check_branch
    %45 = sbr.rel (0) target = $region53
  $region52: #{tpu_custom_call.1} parent=0 // pred_region
    _
  $region53: #{tpu_custom_call.1} parent=0 // pred_fallthru
    _
  %v46 = vld [vmem:[%s1] sm:$0xff]
  %v47 = vld [vmem:[%s1 + $0x8] sm:$0xff]
  %v48 = vld [vmem:[%s1 + $0x10] sm:$0xff]
  %v49 = vld [vmem:[%s1 + $0x18] sm:$0xff]
  %v50 = vld [vmem:[%s1 + $0x20] sm:$0xff]
  %v51 = vld [vmem:[%s1 + $0x28] sm:$0xff]
  %v52 = vld [vmem:[%s1 + $0x30] sm:$0xff]
  %v53 = vld [vmem:[%s1 + $0x38] sm:$0xff]
  %v54 = vld [vmem:[%s1 + $0x40] sm:$0xff]
  %v55 = vld [vmem:[%s1 + $0x48] sm:$0xff]
  %v56 = vld [vmem:[%s1 + $0x50] sm:$0xff]
  %v57 = vld [vmem:[%s1 + $0x58] sm:$0xff]
  %v58 = vld [vmem:[%s2] sm:$0xff]
  %v59 = vld [vmem:[%s2 + $0x8] sm:$0xff]
  %v60 = vld [vmem:[%s2 + $0x10] sm:$0xff]
  %v61 = vld [vmem:[%s3] sm:$0x1]
  %v63 = vlaneseq
  %v64 = vshrl.u32 %v63, 7
  %v65 = vsub.s32 0, %v64
  %v66 = vrot.slane %v61, %v65
  %vm68 = vcmask 195584
  %v70 = vsel %vm68, %v46, 0
  %v73 = vsel %vm68, %v47, 0
  %v76 = vsel %vm68, %v48, 0
  %v79 = vsel %vm68, %v49, 0
  %v82 = vsel %vm68, %v50, 0
  %v85 = vsel %vm68, %v51, 0
  %v88 = vsel %vm68, %v52, 0
  %v91 = vsel %vm68, %v53, 0
  %v94 = vsel %vm68, %v54, 0
  %v97 = vsel %vm68, %v55, 0
  %v100 = vsel %vm68, %v56, 0
  %v103 = vsel %vm68, %v57, 0
  %105 = vmatprep.subr.mxu0 0.0
  %106 = vmatpush1.msra.mxu0 0.0
  %107 = vmatprep.subr.mxu0 0.0
  %108 = vmatpush1.msra.mxu0 0.0
  %109 = vmatprep.subr.mxu0 0.0
  %110 = vmatpush1.msra.mxu0 0.0
  %111 = vmatprep.subr.mxu0 0.0
  %112 = vmatpush1.msra.mxu0 0.0
  %113 = vmatprep.subr.mxu0 0.0
  %114 = vmatpush1.msra.mxu0 0.0
  %115 = vmatprep.subr.mxu0 0.0
  %116 = vmatpush1.msra.mxu0 0.0
  %117 = vmatprep.subr.mxu0 0.0
  %118 = vmatpush1.msra.mxu0 0.0
  %119 = vmatprep.subr.mxu0 0.0
  %120 = vmatpush1.msra.mxu0 0.0
  %121 = vmatprep.subr.mxu0 0.0
  %122 = vmatpush1.msra.mxu0 0.0
  %123 = vmatprep.subr.mxu0 0.0
  %124 = vmatpush1.msra.mxu0 0.0
  %125 = vmatprep.subr.mxu0 0.0
  %126 = vmatpush1.msra.mxu0 0.0
  %127 = vmatprep.subr.mxu0 0.0
  %128 = vmatpush1.msra.mxu0 0.0
  %129 = vmatprep.subr.mxu0 0.0
  %130 = vmatpush1.msra.mxu0 0.0
  %131 = vmatprep.subr.mxu0 0.0
  %132 = vmatpush1.msra.mxu0 %v60
  %133 = vmatprep.subr.mxu0 0.0
  %134 = vmatpush1.msra.mxu0 %v59
  %135 = vmatprep.subr.mxu0 0.0
  %136 = vmatpush1.msra.mxu0 %v58
  %137 = vmatprep.subr.mxu0 0.0
  %138 = vmatpush2.msra.mxu0 0.0
  %139 = vmatprep.subr.mxu0 0.0
  %140 = vmatpush2.msra.mxu0 0.0
  %141 = vmatprep.subr.mxu0 0.0
  %142 = vmatpush2.msra.mxu0 0.0
  %143 = vmatprep.subr.mxu0 0.0
  %144 = vmatpush2.msra.mxu0 0.0
  %145 = vmatprep.subr.mxu0 0.0
  %146 = vmatpush2.msra.mxu0 0.0
  %147 = vmatprep.subr.mxu0 0.0
  %148 = vmatpush2.msra.mxu0 0.0
  %149 = vmatprep.subr.mxu0 0.0
  %150 = vmatpush2.msra.mxu0 0.0
  %151 = vmatprep.subr.mxu0 0.0
  %152 = vmatpush2.msra.mxu0 0.0
  %153 = vmatprep.subr.mxu0 0.0
  %154 = vmatpush2.msra.mxu0 0.0
  %155 = vmatprep.subr.mxu0 0.0
  %156 = vmatpush2.msra.mxu0 0.0
  %157 = vmatprep.subr.mxu0 0.0
  %158 = vmatpush2.msra.mxu0 0.0
  %159 = vmatprep.subr.mxu0 0.0
  %160 = vmatpush2.msra.mxu0 0.0
  %161 = vmatprep.subr.mxu0 0.0
  %162 = vmatpush2.msra.mxu0 0.0
  %163 = vmatprep.subr.mxu0 0.0
  %164 = vmatpush2.msra.mxu0 0.0
  %165 = vmatprep.subr.mxu0 0.0
  %166 = vmatpush2.msra.mxu0 0.0
  %167 = vmatprep.subr.mxu0 0.0
  %168 = vmatpush2.msra.mxu0 0.0
  %169 = vmatprep.mubr.f32.mxu0 0.0
  %170 = vmatmul.mubr.f32.gmra.mxu0 %v70
  %v171 = vpop.f32.mrf.mxu0
  %v172 = vadd.f32 %v66, %v171
  %v173 = vpop.f32.mrf.mxu0
  %174 = vmatprep.mubr.f32.mxu0 0.0
  %175 = vmatmul.mubr.f32.gmra.mxu0 %v73
  %v176 = vpop.f32.mrf.mxu0
  %v177 = vadd.f32 %v66, %v176
  %v178 = vpop.f32.mrf.mxu0
  %179 = vmatprep.mubr.f32.mxu0 0.0
  %180 = vmatmul.mubr.f32.gmra.mxu0 %v76
  %v181 = vpop.f32.mrf.mxu0
  %v182 = vadd.f32 %v66, %v181
  %v183 = vpop.f32.mrf.mxu0
  %184 = vmatprep.mubr.f32.mxu0 0.0
  %185 = vmatmul.mubr.f32.gmra.mxu0 %v79
  %v186 = vpop.f32.mrf.mxu0
  %v187 = vadd.f32 %v66, %v186
  %v188 = vpop.f32.mrf.mxu0
  %189 = vmatprep.mubr.f32.mxu0 0.0
  %190 = vmatmul.mubr.f32.gmra.mxu0 %v82
  %v191 = vpop.f32.mrf.mxu0
  %v192 = vadd.f32 %v66, %v191
  %v193 = vpop.f32.mrf.mxu0
  %194 = vmatprep.mubr.f32.mxu0 0.0
  %195 = vmatmul.mubr.f32.gmra.mxu0 %v85
  %v196 = vpop.f32.mrf.mxu0
  %v197 = vadd.f32 %v66, %v196
  %v198 = vpop.f32.mrf.mxu0
  %199 = vmatprep.mubr.f32.mxu0 0.0
  %200 = vmatmul.mubr.f32.gmra.mxu0 %v88
  %v201 = vpop.f32.mrf.mxu0
  %v202 = vadd.f32 %v66, %v201
  %v203 = vpop.f32.mrf.mxu0
  %204 = vmatprep.mubr.f32.mxu0 0.0
  %205 = vmatmul.mubr.f32.gmra.mxu0 %v91
  %v206 = vpop.f32.mrf.mxu0
  %v207 = vadd.f32 %v66, %v206
  %v208 = vpop.f32.mrf.mxu0
  %209 = vmatprep.mubr.f32.mxu0 0.0
  %210 = vmatmul.mubr.f32.gmra.mxu0 %v94
  %v211 = vpop.f32.mrf.mxu0
  %v212 = vadd.f32 %v66, %v211
  %v213 = vpop.f32.mrf.mxu0
  %214 = vmatprep.mubr.f32.mxu0 0.0
  %215 = vmatmul.mubr.f32.gmra.mxu0 %v97
  %v216 = vpop.f32.mrf.mxu0
  %v217 = vadd.f32 %v66, %v216
  %v218 = vpop.f32.mrf.mxu0
  %219 = vmatprep.mubr.f32.mxu0 0.0
  %220 = vmatmul.mubr.f32.gmra.mxu0 %v100
  %v221 = vpop.f32.mrf.mxu0
  %v222 = vadd.f32 %v66, %v221
  %v223 = vpop.f32.mrf.mxu0
  %224 = vmatprep.mubr.f32.mxu0 0.0
  %225 = vmatmul.mubr.f32.gmra.mxu0 %v103
  %v226 = vpop.f32.mrf.mxu0
  %v227 = vadd.f32 %v66, %v226
  %v228 = vpop.f32.mrf.mxu0
  %229 = vdwg.mxu0
  %v230 = vmax.f32 %v172, 0.0
  %v231 = vmax.f32 %v177, 0.0
  %v232 = vmax.f32 %v182, 0.0
  %v233 = vmax.f32 %v187, 0.0
  %v234 = vmax.f32 %v192, 0.0
  %v235 = vmax.f32 %v197, 0.0
  %v236 = vmax.f32 %v202, 0.0
  %v237 = vmax.f32 %v207, 0.0
  %v238 = vmax.f32 %v212, 0.0
  %v239 = vmax.f32 %v217, 0.0
  %v240 = vmax.f32 %v222, 0.0
  %v241 = vmax.f32 %v227, 0.0
  %v242 = vld [vmem:[%s4] sm:$0xff]
  %v243 = vld [vmem:[%s4 + $0x8] sm:$0xff]
  %v244 = vld [vmem:[%s5] sm:$0x1]
  %v246 = vlaneseq
  %v247 = vshrl.u32 %v246, 7
  %v248 = vsub.s32 0, %v247
  %v249 = vrot.slane %v244, %v248
  %vm251 = vcmask 130048
  %v253 = vsel %vm251, %v230, 0
  %v256 = vsel %vm251, %v231, 0
  %v259 = vsel %vm251, %v232, 0
  %v262 = vsel %vm251, %v233, 0
  %v265 = vsel %vm251, %v234, 0
  %v268 = vsel %vm251, %v235, 0
  %v271 = vsel %vm251, %v236, 0
  %v274 = vsel %vm251, %v237, 0
  %v277 = vsel %vm251, %v238, 0
  %v280 = vsel %vm251, %v239, 0
  %v283 = vsel %vm251, %v240, 0
  %v286 = vsel %vm251, %v241, 0
  %288 = vmatprep.subr.mxu0 0.0
  %289 = vmatpush1.msra.mxu0 0.0
  %290 = vmatprep.subr.mxu0 0.0
  %291 = vmatpush1.msra.mxu0 0.0
  %292 = vmatprep.subr.mxu0 0.0
  %293 = vmatpush1.msra.mxu0 0.0
  %294 = vmatprep.subr.mxu0 0.0
  %295 = vmatpush1.msra.mxu0 0.0
  %296 = vmatprep.subr.mxu0 0.0
  %297 = vmatpush1.msra.mxu0 0.0
  %298 = vmatprep.subr.mxu0 0.0
  %299 = vmatpush1.msra.mxu0 0.0
  %300 = vmatprep.subr.mxu0 0.0
  %301 = vmatpush1.msra.mxu0 0.0
  %302 = vmatprep.subr.mxu0 0.0
  %303 = vmatpush1.msra.mxu0 0.0
  %304 = vmatprep.subr.mxu0 0.0
  %305 = vmatpush1.msra.mxu0 0.0
  %306 = vmatprep.subr.mxu0 0.0
  %307 = vmatpush1.msra.mxu0 0.0
  %308 = vmatprep.subr.mxu0 0.0
  %309 = vmatpush1.msra.mxu0 0.0
  %310 = vmatprep.subr.mxu0 0.0
  %311 = vmatpush1.msra.mxu0 0.0
  %312 = vmatprep.subr.mxu0 0.0
  %313 = vmatpush1.msra.mxu0 0.0
  %314 = vmatprep.subr.mxu0 0.0
  %315 = vmatpush1.msra.mxu0 0.0
  %316 = vmatprep.subr.mxu0 0.0
  %317 = vmatpush1.msra.mxu0 %v243
  %318 = vmatprep.subr.mxu0 0.0
  %319 = vmatpush1.msra.mxu0 %v242
  %320 = vmatprep.subr.mxu0 0.0
  %321 = vmatpush2.msra.mxu0 0.0
  %322 = vmatprep.subr.mxu0 0.0
  %323 = vmatpush2.msra.mxu0 0.0
  %324 = vmatprep.subr.mxu0 0.0
  %325 = vmatpush2.msra.mxu0 0.0
  %326 = vmatprep.subr.mxu0 0.0
  %327 = vmatpush2.msra.mxu0 0.0
  %328 = vmatprep.subr.mxu0 0.0
  %329 = vmatpush2.msra.mxu0 0.0
  %330 = vmatprep.subr.mxu0 0.0
  %331 = vmatpush2.msra.mxu0 0.0
  %332 = vmatprep.subr.mxu0 0.0
  %333 = vmatpush2.msra.mxu0 0.0
  %334 = vmatprep.subr.mxu0 0.0
  %335 = vmatpush2.msra.mxu0 0.0
  %336 = vmatprep.subr.mxu0 0.0
  %337 = vmatpush2.msra.mxu0 0.0
  %338 = vmatprep.subr.mxu0 0.0
  %339 = vmatpush2.msra.mxu0 0.0
  %340 = vmatprep.subr.mxu0 0.0
  %341 = vmatpush2.msra.mxu0 0.0
  %342 = vmatprep.subr.mxu0 0.0
  %343 = vmatpush2.msra.mxu0 0.0
  %344 = vmatprep.subr.mxu0 0.0
  %345 = vmatpush2.msra.mxu0 0.0
  %346 = vmatprep.subr.mxu0 0.0
  %347 = vmatpush2.msra.mxu0 0.0
  %348 = vmatprep.subr.mxu0 0.0
  %349 = vmatpush2.msra.mxu0 0.0
  %350 = vmatprep.subr.mxu0 0.0
  %351 = vmatpush2.msra.mxu0 0.0
  %352 = vmatprep.mubr.f32.mxu0 0.0
  %353 = vmatmul.mubr.f32.gmra.mxu0 %v253
  %v354 = vpop.f32.mrf.mxu0
  %v355 = vadd.f32 %v249, %v354
  %v356 = vpop.f32.mrf.mxu0
  %357 = vmatprep.mubr.f32.mxu0 0.0
  %358 = vmatmul.mubr.f32.gmra.mxu0 %v256
  %v359 = vpop.f32.mrf.mxu0
  %v360 = vadd.f32 %v249, %v359
  %v361 = vpop.f32.mrf.mxu0
  %362 = vmatprep.mubr.f32.mxu0 0.0
  %363 = vmatmul.mubr.f32.gmra.mxu0 %v259
  %v364 = vpop.f32.mrf.mxu0
  %v365 = vadd.f32 %v249, %v364
  %v366 = vpop.f32.mrf.mxu0
  %367 = vmatprep.mubr.f32.mxu0 0.0
  %368 = vmatmul.mubr.f32.gmra.mxu0 %v262
  %v369 = vpop.f32.mrf.mxu0
  %v370 = vadd.f32 %v249, %v369
  %v371 = vpop.f32.mrf.mxu0
  %372 = vmatprep.mubr.f32.mxu0 0.0
  %373 = vmatmul.mubr.f32.gmra.mxu0 %v265
  %v374 = vpop.f32.mrf.mxu0
  %v375 = vadd.f32 %v249, %v374
  %v376 = vpop.f32.mrf.mxu0
  %377 = vmatprep.mubr.f32.mxu0 0.0
  %378 = vmatmul.mubr.f32.gmra.mxu0 %v268
  %v379 = vpop.f32.mrf.mxu0
  %v380 = vadd.f32 %v249, %v379
  %v381 = vpop.f32.mrf.mxu0
  %382 = vmatprep.mubr.f32.mxu0 0.0
  %383 = vmatmul.mubr.f32.gmra.mxu0 %v271
  %v384 = vpop.f32.mrf.mxu0
  %v385 = vadd.f32 %v249, %v384
  %v386 = vpop.f32.mrf.mxu0
  %387 = vmatprep.mubr.f32.mxu0 0.0
  %388 = vmatmul.mubr.f32.gmra.mxu0 %v274
  %v389 = vpop.f32.mrf.mxu0
  %v390 = vadd.f32 %v249, %v389
  %v391 = vpop.f32.mrf.mxu0
  %392 = vmatprep.mubr.f32.mxu0 0.0
  %393 = vmatmul.mubr.f32.gmra.mxu0 %v277
  %v394 = vpop.f32.mrf.mxu0
  %v395 = vadd.f32 %v249, %v394
  %v396 = vpop.f32.mrf.mxu0
  %397 = vmatprep.mubr.f32.mxu0 0.0
  %398 = vmatmul.mubr.f32.gmra.mxu0 %v280
  %v399 = vpop.f32.mrf.mxu0
  %v400 = vadd.f32 %v249, %v399
  %v401 = vpop.f32.mrf.mxu0
  %402 = vmatprep.mubr.f32.mxu0 0.0
  %403 = vmatmul.mubr.f32.gmra.mxu0 %v283
  %v404 = vpop.f32.mrf.mxu0
  %v405 = vadd.f32 %v249, %v404
  %v406 = vpop.f32.mrf.mxu0
  %407 = vmatprep.mubr.f32.mxu0 0.0
  %408 = vmatmul.mubr.f32.gmra.mxu0 %v286
  %v409 = vpop.f32.mrf.mxu0
  %v410 = vadd.f32 %v249, %v409
  %v411 = vpop.f32.mrf.mxu0
  %412 = vdwg.mxu0
  %v413 = vmax.f32 %v355, 0.0
  %v414 = vmax.f32 %v360, 0.0
  %v415 = vmax.f32 %v365, 0.0
  %v416 = vmax.f32 %v370, 0.0
  %v417 = vmax.f32 %v375, 0.0
  %v418 = vmax.f32 %v380, 0.0
  %v419 = vmax.f32 %v385, 0.0
  %v420 = vmax.f32 %v390, 0.0
  %v421 = vmax.f32 %v395, 0.0
  %v422 = vmax.f32 %v400, 0.0
  %v423 = vmax.f32 %v405, 0.0
  %v424 = vmax.f32 %v410, 0.0
  %v425 = vlaneseq
  %v426 = vshrl.u32 %v425, 7
  %v427 = vadd.s32 %v426, 8
  %v428 = vadd.s32 %v426, 16
  %v429 = vadd.s32 %v426, 24
  %v430 = vadd.s32 %v426, 32
  %v431 = vadd.s32 %v426, 40
  %v432 = vadd.s32 %v426, 48
  %v433 = vadd.s32 %v426, 56
  %v434 = vadd.s32 %v426, 64
  %v435 = vadd.s32 %v426, 72
  %v436 = vadd.s32 %v426, 80
  %v437 = vadd.s32 %v426, 88
  %vm438 = vcmp.lt.s32.totalorder %v426, 0
  %v439 = vsub.s32 0, %v426
  %v440 = vsel %vm438, %v439, %v426
  %v441 = vshrl.u32 %v440, 4
  %v442 = vand.u32 %v440, 15
  %v443 = vsub.s32 0, %v442
  %v444 = vsel %vm438, %v443, %v442
  %vm445 = vcmp.lt.s32.totalorder %v427, 0
  %v446 = vsub.s32 0, %v427
  %v447 = vsel %vm445, %v446, %v427
  %v448 = vshrl.u32 %v447, 4
  %v449 = vand.u32 %v447, 15
  %v450 = vsub.s32 0, %v449
  %v451 = vsel %vm445, %v450, %v449
  %vm452 = vcmp.lt.s32.totalorder %v428, 0
  %v453 = vsub.s32 0, %v428
  %v454 = vsel %vm452, %v453, %v428
  %v455 = vshrl.u32 %v454, 4
  %v456 = vand.u32 %v454, 15
  %v457 = vsub.s32 0, %v456
  %v458 = vsel %vm452, %v457, %v456
  %vm459 = vcmp.lt.s32.totalorder %v429, 0
  %v460 = vsub.s32 0, %v429
  %v461 = vsel %vm459, %v460, %v429
  %v462 = vshrl.u32 %v461, 4
  %v463 = vand.u32 %v461, 15
  %v464 = vsub.s32 0, %v463
  %v465 = vsel %vm459, %v464, %v463
  %vm466 = vcmp.lt.s32.totalorder %v430, 0
  %v467 = vsub.s32 0, %v430
  %v468 = vsel %vm466, %v467, %v430
  %v469 = vshrl.u32 %v468, 4
  %v470 = vand.u32 %v468, 15
  %v471 = vsub.s32 0, %v470
  %v472 = vsel %vm466, %v471, %v470
  %vm473 = vcmp.lt.s32.totalorder %v431, 0
  %v474 = vsub.s32 0, %v431
  %v475 = vsel %vm473, %v474, %v431
  %v476 = vshrl.u32 %v475, 4
  %v477 = vand.u32 %v475, 15
  %v478 = vsub.s32 0, %v477
  %v479 = vsel %vm473, %v478, %v477
  %vm480 = vcmp.lt.s32.totalorder %v432, 0
  %v481 = vsub.s32 0, %v432
  %v482 = vsel %vm480, %v481, %v432
  %v483 = vshrl.u32 %v482, 4
  %v484 = vand.u32 %v482, 15
  %v485 = vsub.s32 0, %v484
  %v486 = vsel %vm480, %v485, %v484
  %vm487 = vcmp.lt.s32.totalorder %v433, 0
  %v488 = vsub.s32 0, %v433
  %v489 = vsel %vm487, %v488, %v433
  %v490 = vshrl.u32 %v489, 4
  %v491 = vand.u32 %v489, 15
  %v492 = vsub.s32 0, %v491
  %v493 = vsel %vm487, %v492, %v491
  %vm494 = vcmp.lt.s32.totalorder %v434, 0
  %v495 = vsub.s32 0, %v434
  %v496 = vsel %vm494, %v495, %v434
  %v497 = vshrl.u32 %v496, 4
  %v498 = vand.u32 %v496, 15
  %v499 = vsub.s32 0, %v498
  %v500 = vsel %vm494, %v499, %v498
  %vm501 = vcmp.lt.s32.totalorder %v435, 0
  %v502 = vsub.s32 0, %v435
  %v503 = vsel %vm501, %v502, %v435
  %v504 = vshrl.u32 %v503, 4
  %v505 = vand.u32 %v503, 15
  %v506 = vsub.s32 0, %v505
  %v507 = vsel %vm501, %v506, %v505
  %vm508 = vcmp.lt.s32.totalorder %v436, 0
  %v509 = vsub.s32 0, %v436
  %v510 = vsel %vm508, %v509, %v436
  %v511 = vshrl.u32 %v510, 4
  %v512 = vand.u32 %v510, 15
  %v513 = vsub.s32 0, %v512
  %v514 = vsel %vm508, %v513, %v512
  %vm515 = vcmp.lt.s32.totalorder %v437, 0
  %v516 = vsub.s32 0, %v437
  %v517 = vsel %vm515, %v516, %v437
  %v518 = vshrl.u32 %v517, 4
  %v519 = vand.u32 %v517, 15
  %v520 = vsub.s32 0, %v519
  %v521 = vsel %vm515, %v520, %v519
  %vm522 = vcmp.ne.s32.totalorder %v444, 0
  %vm523 = vcmp.ne.s32.totalorder %v451, 0
  %vm524 = vcmp.ne.s32.totalorder %v458, 0
  %vm525 = vcmp.ne.s32.totalorder %v465, 0
  %vm526 = vcmp.ne.s32.totalorder %v472, 0
  %vm527 = vcmp.ne.s32.totalorder %v479, 0
  %vm528 = vcmp.ne.s32.totalorder %v486, 0
  %vm529 = vcmp.ne.s32.totalorder %v493, 0
  %vm530 = vcmp.ne.s32.totalorder %v500, 0
  %vm531 = vcmp.ne.s32.totalorder %v507, 0
  %vm532 = vcmp.ne.s32.totalorder %v514, 0
  %vm533 = vcmp.ne.s32.totalorder %v521, 0
  %vm534 = vcmp.lt.s32.totalorder %v444, 0
  %vm535 = vcmp.lt.s32.totalorder %v451, 0
  %vm536 = vcmp.lt.s32.totalorder %v458, 0
  %vm537 = vcmp.lt.s32.totalorder %v465, 0
  %vm538 = vcmp.lt.s32.totalorder %v472, 0
  %vm539 = vcmp.lt.s32.totalorder %v479, 0
  %vm540 = vcmp.lt.s32.totalorder %v486, 0
  %vm541 = vcmp.lt.s32.totalorder %v493, 0
  %vm542 = vcmp.lt.s32.totalorder %v500, 0
  %vm543 = vcmp.lt.s32.totalorder %v507, 0
  %vm544 = vcmp.lt.s32.totalorder %v514, 0
  %vm545 = vcmp.lt.s32.totalorder %v521, 0
  %vm546 = vmand %vm534, %vm522
  %vm547 = vmand %vm535, %vm523
  %vm548 = vmand %vm536, %vm524
  %vm549 = vmand %vm537, %vm525
  %vm550 = vmand %vm538, %vm526
  %vm551 = vmand %vm539, %vm527
  %vm552 = vmand %vm540, %vm528
  %vm553 = vmand %vm541, %vm529
  %vm554 = vmand %vm542, %vm530
  %vm555 = vmand %vm543, %vm531
  %vm556 = vmand %vm544, %vm532
  %vm557 = vmand %vm545, %vm533
  %v558 = vadd.s32 %v444, 16
  %v559 = vadd.s32 %v451, 16
  %v560 = vadd.s32 %v458, 16
  %v561 = vadd.s32 %v465, 16
  %v562 = vadd.s32 %v472, 16
  %v563 = vadd.s32 %v479, 16
  %v564 = vadd.s32 %v486, 16
  %v565 = vadd.s32 %v493, 16
  %v566 = vadd.s32 %v500, 16
  %v567 = vadd.s32 %v507, 16
  %v568 = vadd.s32 %v514, 16
  %v569 = vadd.s32 %v521, 16
  %v570 = vsel %vm546, %v558, %v444
  %v571 = vsel %vm547, %v559, %v451
  %v572 = vsel %vm548, %v560, %v458
  %v573 = vsel %vm549, %v561, %v465
  %v574 = vsel %vm550, %v562, %v472
  %v575 = vsel %vm551, %v563, %v479
  %v576 = vsel %vm552, %v564, %v486
  %v577 = vsel %vm553, %v565, %v493
  %v578 = vsel %vm554, %v566, %v500
  %v579 = vsel %vm555, %v567, %v507
  %v580 = vsel %vm556, %v568, %v514
  %v581 = vsel %vm557, %v569, %v521
  %vm582 = vcmp.lt.s32.totalorder %v570, 0
  %v583 = vsub.s32 0, %v570
  %v584 = vsel %vm582, %v583, %v570
  %v585 = vmul.u32.u64.compose %v584, 3435973837
  %v586 = vextract.low.u32 %v585
  %v587 = vextract.high.u32 %v585
  %v588 = vshrl.u32 %v587, 2
  %v589 = vmul.u32 %v588, 5
  %v590 = vsub.s32 %v584, %v589
  %v591 = vsub.s32 0, %v590
  %v592 = vsel %vm582, %v591, %v590
  %vm593 = vcmp.lt.s32.totalorder %v571, 0
  %v594 = vsub.s32 0, %v571
  %v595 = vsel %vm593, %v594, %v571
  %v596 = vmul.u32.u64.compose %v595, 3435973837
  %v597 = vextract.low.u32 %v596
  %v598 = vextract.high.u32 %v596
  %v599 = vshrl.u32 %v598, 2
  %v600 = vmul.u32 %v599, 5
  %v601 = vsub.s32 %v595, %v600
  %v602 = vsub.s32 0, %v601
  %v603 = vsel %vm593, %v602, %v601
  %vm604 = vcmp.lt.s32.totalorder %v572, 0
  %v605 = vsub.s32 0, %v572
  %v606 = vsel %vm604, %v605, %v572
  %v607 = vmul.u32.u64.compose %v606, 3435973837
  %v608 = vextract.low.u32 %v607
  %v609 = vextract.high.u32 %v607
  %v610 = vshrl.u32 %v609, 2
  %v611 = vmul.u32 %v610, 5
  %v612 = vsub.s32 %v606, %v611
  %v613 = vsub.s32 0, %v612
  %v614 = vsel %vm604, %v613, %v612
  %vm615 = vcmp.lt.s32.totalorder %v573, 0
  %v616 = vsub.s32 0, %v573
  %v617 = vsel %vm615, %v616, %v573
  %v618 = vmul.u32.u64.compose %v617, 3435973837
  %v619 = vextract.low.u32 %v618
  %v620 = vextract.high.u32 %v618
  %v621 = vshrl.u32 %v620, 2
  %v622 = vmul.u32 %v621, 5
  %v623 = vsub.s32 %v617, %v622
  %v624 = vsub.s32 0, %v623
  %v625 = vsel %vm615, %v624, %v623
  %vm626 = vcmp.lt.s32.totalorder %v574, 0
  %v627 = vsub.s32 0, %v574
  %v628 = vsel %vm626, %v627, %v574
  %v629 = vmul.u32.u64.compose %v628, 3435973837
  %v630 = vextract.low.u32 %v629
  %v631 = vextract.high.u32 %v629
  %v632 = vshrl.u32 %v631, 2
  %v633 = vmul.u32 %v632, 5
  %v634 = vsub.s32 %v628, %v633
  %v635 = vsub.s32 0, %v634
  %v636 = vsel %vm626, %v635, %v634
  %vm637 = vcmp.lt.s32.totalorder %v575, 0
  %v638 = vsub.s32 0, %v575
  %v639 = vsel %vm637, %v638, %v575
  %v640 = vmul.u32.u64.compose %v639, 3435973837
  %v641 = vextract.low.u32 %v640
  %v642 = vextract.high.u32 %v640
  %v643 = vshrl.u32 %v642, 2
  %v644 = vmul.u32 %v643, 5
  %v645 = vsub.s32 %v639, %v644
  %v646 = vsub.s32 0, %v645
  %v647 = vsel %vm637, %v646, %v645
  %vm648 = vcmp.lt.s32.totalorder %v576, 0
  %v649 = vsub.s32 0, %v576
  %v650 = vsel %vm648, %v649, %v576
  %v651 = vmul.u32.u64.compose %v650, 3435973837
  %v652 = vextract.low.u32 %v651
  %v653 = vextract.high.u32 %v651
  %v654 = vshrl.u32 %v653, 2
  %v655 = vmul.u32 %v654, 5
  %v656 = vsub.s32 %v650, %v655
  %v657 = vsub.s32 0, %v656
  %v658 = vsel %vm648, %v657, %v656
  %vm659 = vcmp.lt.s32.totalorder %v577, 0
  %v660 = vsub.s32 0, %v577
  %v661 = vsel %vm659, %v660, %v577
  %v662 = vmul.u32.u64.compose %v661, 3435973837
  %v663 = vextract.low.u32 %v662
  %v664 = vextract.high.u32 %v662
  %v665 = vshrl.u32 %v664, 2
  %v666 = vmul.u32 %v665, 5
  %v667 = vsub.s32 %v661, %v666
  %v668 = vsub.s32 0, %v667
  %v669 = vsel %vm659, %v668, %v667
  %vm670 = vcmp.lt.s32.totalorder %v578, 0
  %v671 = vsub.s32 0, %v578
  %v672 = vsel %vm670, %v671, %v578
  %v673 = vmul.u32.u64.compose %v672, 3435973837
  %v674 = vextract.low.u32 %v673
  %v675 = vextract.high.u32 %v673
  %v676 = vshrl.u32 %v675, 2
  %v677 = vmul.u32 %v676, 5
  %v678 = vsub.s32 %v672, %v677
  %v679 = vsub.s32 0, %v678
  %v680 = vsel %vm670, %v679, %v678
  %vm681 = vcmp.lt.s32.totalorder %v579, 0
  %v682 = vsub.s32 0, %v579
  %v683 = vsel %vm681, %v682, %v579
  %v684 = vmul.u32.u64.compose %v683, 3435973837
  %v685 = vextract.low.u32 %v684
  %v686 = vextract.high.u32 %v684
  %v687 = vshrl.u32 %v686, 2
  %v688 = vmul.u32 %v687, 5
  %v689 = vsub.s32 %v683, %v688
  %v690 = vsub.s32 0, %v689
  %v691 = vsel %vm681, %v690, %v689
  %vm692 = vcmp.lt.s32.totalorder %v580, 0
  %v693 = vsub.s32 0, %v580
  %v694 = vsel %vm692, %v693, %v580
  %v695 = vmul.u32.u64.compose %v694, 3435973837
  %v696 = vextract.low.u32 %v695
  %v697 = vextract.high.u32 %v695
  %v698 = vshrl.u32 %v697, 2
  %v699 = vmul.u32 %v698, 5
  %v700 = vsub.s32 %v694, %v699
  %v701 = vsub.s32 0, %v700
  %v702 = vsel %vm692, %v701, %v700
  %vm703 = vcmp.lt.s32.totalorder %v581, 0
  %v704 = vsub.s32 0, %v581
  %v705 = vsel %vm703, %v704, %v581
  %v706 = vmul.u32.u64.compose %v705, 3435973837
  %v707 = vextract.low.u32 %v706
  %v708 = vextract.high.u32 %v706
  %v709 = vshrl.u32 %v708, 2
  %v710 = vmul.u32 %v709, 5
  %v711 = vsub.s32 %v705, %v710
  %v712 = vsub.s32 0, %v711
  %v713 = vsel %vm703, %v712, %v711
  %vm714 = vcmp.ne.s32.totalorder %v592, 0
  %vm715 = vcmp.ne.s32.totalorder %v603, 0
  %vm716 = vcmp.ne.s32.totalorder %v614, 0
  %vm717 = vcmp.ne.s32.totalorder %v625, 0
  %vm718 = vcmp.ne.s32.totalorder %v636, 0
  %vm719 = vcmp.ne.s32.totalorder %v647, 0
  %vm720 = vcmp.ne.s32.totalorder %v658, 0
  %vm721 = vcmp.ne.s32.totalorder %v669, 0
  %vm722 = vcmp.ne.s32.totalorder %v680, 0
  %vm723 = vcmp.ne.s32.totalorder %v691, 0
  %vm724 = vcmp.ne.s32.totalorder %v702, 0
  %vm725 = vcmp.ne.s32.totalorder %v713, 0
  %vm726 = vcmp.lt.s32.totalorder %v592, 0
  %vm727 = vcmp.lt.s32.totalorder %v603, 0
  %vm728 = vcmp.lt.s32.totalorder %v614, 0
  %vm729 = vcmp.lt.s32.totalorder %v625, 0
  %vm730 = vcmp.lt.s32.totalorder %v636, 0
  %vm731 = vcmp.lt.s32.totalorder %v647, 0
  %vm732 = vcmp.lt.s32.totalorder %v658, 0
  %vm733 = vcmp.lt.s32.totalorder %v669, 0
  %vm734 = vcmp.lt.s32.totalorder %v680, 0
  %vm735 = vcmp.lt.s32.totalorder %v691, 0
  %vm736 = vcmp.lt.s32.totalorder %v702, 0
  %vm737 = vcmp.lt.s32.totalorder %v713, 0
  %vm738 = vmand %vm726, %vm714
  %vm739 = vmand %vm727, %vm715
  %vm740 = vmand %vm728, %vm716
  %vm741 = vmand %vm729, %vm717
  %vm742 = vmand %vm730, %vm718
  %vm743 = vmand %vm731, %vm719
  %vm744 = vmand %vm732, %vm720
  %vm745 = vmand %vm733, %vm721
  %vm746 = vmand %vm734, %vm722
  %vm747 = vmand %vm735, %vm723
  %vm748 = vmand %vm736, %vm724
  %vm749 = vmand %vm737, %vm725
  %v750 = vadd.s32 %v592, 5
  %v751 = vadd.s32 %v603, 5
  %v752 = vadd.s32 %v614, 5
  %v753 = vadd.s32 %v625, 5
  %v754 = vadd.s32 %v636, 5
  %v755 = vadd.s32 %v647, 5
  %v756 = vadd.s32 %v658, 5
  %v757 = vadd.s32 %v669, 5
  %v758 = vadd.s32 %v680, 5
  %v759 = vadd.s32 %v691, 5
  %v760 = vadd.s32 %v702, 5
  %v761 = vadd.s32 %v713, 5
  %v762 = vsel %vm738, %v750, %v592
  %v763 = vsel %vm739, %v751, %v603
  %v764 = vsel %vm740, %v752, %v614
  %v765 = vsel %vm741, %v753, %v625
  %v766 = vsel %vm742, %v754, %v636
  %v767 = vsel %vm743, %v755, %v647
  %v768 = vsel %vm744, %v756, %v658
  %v769 = vsel %vm745, %v757, %v669
  %v770 = vsel %vm746, %v758, %v680
  %v771 = vsel %vm747, %v759, %v691
  %v772 = vsel %vm748, %v760, %v702
  %v773 = vsel %vm749, %v761, %v713
  %vm774 = vcmp.ne.s32.totalorder %v762, 0
  %vm775 = vcmp.ne.s32.totalorder %v763, 0
  %vm776 = vcmp.ne.s32.totalorder %v764, 0
  %vm777 = vcmp.ne.s32.totalorder %v765, 0
  %vm778 = vcmp.ne.s32.totalorder %v766, 0
  %vm779 = vcmp.ne.s32.totalorder %v767, 0
  %vm780 = vcmp.ne.s32.totalorder %v768, 0
  %vm781 = vcmp.ne.s32.totalorder %v769, 0
  %vm782 = vcmp.ne.s32.totalorder %v770, 0
  %vm783 = vcmp.ne.s32.totalorder %v771, 0
  %vm784 = vcmp.ne.s32.totalorder %v772, 0
  %vm785 = vcmp.ne.s32.totalorder %v773, 0
  %vm786 = vcmp.gt.f32.partialorder %v355, 0.0
  %vm787 = vcmp.gt.f32.partialorder %v360, 0.0
  %vm788 = vcmp.gt.f32.partialorder %v365, 0.0
  %vm789 = vcmp.gt.f32.partialorder %v370, 0.0
  %vm790 = vcmp.gt.f32.partialorder %v375, 0.0
  %vm791 = vcmp.gt.f32.partialorder %v380, 0.0
  %vm792 = vcmp.gt.f32.partialorder %v385, 0.0
  %vm793 = vcmp.gt.f32.partialorder %v390, 0.0
  %vm794 = vcmp.gt.f32.partialorder %v395, 0.0
  %vm795 = vcmp.gt.f32.partialorder %v400, 0.0
  %vm796 = vcmp.gt.f32.partialorder %v405, 0.0
  %vm797 = vcmp.gt.f32.partialorder %v410, 0.0
  %vm798 = vmand %vm786, %vm774
  %vm799 = vmand %vm787, %vm775
  %vm800 = vmand %vm788, %vm776
  %vm801 = vmand %vm789, %vm777
  %vm802 = vmand %vm790, %vm778
  %vm803 = vmand %vm791, %vm779
  %vm804 = vmand %vm792, %vm780
  %vm805 = vmand %vm793, %vm781
  %vm806 = vmand %vm794, %vm782
  %vm807 = vmand %vm795, %vm783
  %vm808 = vmand %vm796, %vm784
  %vm809 = vmand %vm797, %vm785
  %v810 = vsel %vm798, 1.0, 0.0
  %v811 = vsel %vm799, 1.0, 0.0
  %v812 = vsel %vm800, 1.0, 0.0
  %v813 = vsel %vm801, 1.0, 0.0
  %v814 = vsel %vm802, 1.0, 0.0
  %v815 = vsel %vm803, 1.0, 0.0
  %v816 = vsel %vm804, 1.0, 0.0
  %v817 = vsel %vm805, 1.0, 0.0
  %v818 = vsel %vm806, 1.0, 0.0
  %v819 = vsel %vm807, 1.0, 0.0
  %v820 = vsel %vm808, 1.0, 0.0
  %v821 = vsel %vm809, 1.0, 0.0
  %823 = vset.pattern.permute.xlu0 16
  %824 = vperm.xlu0 %823, %v810
  %v825 = vpop.permute.xlu0 %824
  %828 = vset.pattern.permute.xlu0 16
  %829 = vperm.xlu0 %828, %v811
  %v830 = vpop.permute.xlu0 %829
  %833 = vset.pattern.permute.xlu0 16
  %834 = vperm.xlu0 %833, %v812
  %v835 = vpop.permute.xlu0 %834
  %838 = vset.pattern.permute.xlu0 16
  %839 = vperm.xlu0 %838, %v813
  %v840 = vpop.permute.xlu0 %839
  %843 = vset.pattern.permute.xlu0 16
  %844 = vperm.xlu0 %843, %v814
  %v845 = vpop.permute.xlu0 %844
  %848 = vset.pattern.permute.xlu0 16
  %849 = vperm.xlu0 %848, %v815
  %v850 = vpop.permute.xlu0 %849
  %853 = vset.pattern.permute.xlu0 16
  %854 = vperm.xlu0 %853, %v816
  %v855 = vpop.permute.xlu0 %854
  %858 = vset.pattern.permute.xlu0 16
  %859 = vperm.xlu0 %858, %v817
  %v860 = vpop.permute.xlu0 %859
  %863 = vset.pattern.permute.xlu0 16
  %864 = vperm.xlu0 %863, %v818
  %v865 = vpop.permute.xlu0 %864
  %868 = vset.pattern.permute.xlu0 16
  %869 = vperm.xlu0 %868, %v819
  %v870 = vpop.permute.xlu0 %869
  %873 = vset.pattern.permute.xlu0 16
  %874 = vperm.xlu0 %873, %v820
  %v875 = vpop.permute.xlu0 %874
  %878 = vset.pattern.permute.xlu0 16
  %879 = vperm.xlu0 %878, %v821
  %v880 = vpop.permute.xlu0 %879
  %v882 = vmul.f32 %v413, %v825
  %v883 = vmul.f32 %v414, %v830
  %v884 = vmul.f32 %v415, %v835
  %v885 = vmul.f32 %v416, %v840
  %v886 = vmul.f32 %v417, %v845
  %v887 = vmul.f32 %v418, %v850
  %v888 = vmul.f32 %v419, %v855
  %v889 = vmul.f32 %v420, %v860
  %v890 = vmul.f32 %v421, %v865
  %v891 = vmul.f32 %v422, %v870
  %v892 = vmul.f32 %v423, %v875
  %v893 = vmul.f32 %v424, %v880
  %894 = vst.msk [vmem:[#allocation2] sm:$0xff] %vm251, %v882
  %895 = vst.msk [vmem:[#allocation2 + $0x8] sm:$0xff] %vm251, %v883
  %896 = vst.msk [vmem:[#allocation2 + $0x10] sm:$0xff] %vm251, %v884
  %897 = vst.msk [vmem:[#allocation2 + $0x18] sm:$0xff] %vm251, %v885
  %898 = vst.msk [vmem:[#allocation2 + $0x20] sm:$0xff] %vm251, %v886
  %899 = vst.msk [vmem:[#allocation2 + $0x28] sm:$0xff] %vm251, %v887
  %900 = vst.msk [vmem:[#allocation2 + $0x30] sm:$0xff] %vm251, %v888
  %901 = vst.msk [vmem:[#allocation2 + $0x38] sm:$0xff] %vm251, %v889
  %902 = vst.msk [vmem:[#allocation2 + $0x40] sm:$0xff] %vm251, %v890
  %903 = vst.msk [vmem:[#allocation2 + $0x48] sm:$0xff] %vm251, %v891
  %904 = vst.msk [vmem:[#allocation2 + $0x50] sm:$0xff] %vm251, %v892
  %905 = vst.msk [vmem:[#allocation2 + $0x58] sm:$0xff] %vm251, %v893
  %v906 = vld [vmem:[#allocation2] ss:$4 sm:$0xff]
  %s907 = scalar_lea.vmem [#allocation2], 32
  %v908 = vld [vmem:[%s907] ss:$4 sm:$0xff]
  %s909 = scalar_lea.vmem [#allocation2], 64
  %v910 = vld [vmem:[%s909] ss:$4 sm:$0xff]
  %s911 = scalar_lea.vmem [#allocation2], 1
  %v912 = vld [vmem:[%s911] ss:$4 sm:$0xff]
  %s913 = scalar_lea.vmem [#allocation2], 33
  %v914 = vld [vmem:[%s913] ss:$4 sm:$0xff]
  %s915 = scalar_lea.vmem [#allocation2], 65
  %v916 = vld [vmem:[%s915] ss:$4 sm:$0xff]
  %v917 = vadd.f32 %v906, %v912
  %v918 = vadd.f32 %v908, %v914
  %v919 = vadd.f32 %v910, %v916
  %s920 = scalar_lea.vmem [#allocation2], 2
  %v921 = vld [vmem:[%s920] ss:$4 sm:$0xff]
  %s922 = scalar_lea.vmem [#allocation2], 34
  %v923 = vld [vmem:[%s922] ss:$4 sm:$0xff]
  %s924 = scalar_lea.vmem [#allocation2], 66
  %v925 = vld [vmem:[%s924] ss:$4 sm:$0xff]
  %v926 = vadd.f32 %v917, %v921
  %v927 = vadd.f32 %v918, %v923
  %v928 = vadd.f32 %v919, %v925
  %s929 = scalar_lea.vmem [#allocation2], 3
  %v930 = vld [vmem:[%s929] ss:$4 sm:$0xff]
  %s931 = scalar_lea.vmem [#allocation2], 35
  %v932 = vld [vmem:[%s931] ss:$4 sm:$0xff]
  %s933 = scalar_lea.vmem [#allocation2], 67
  %v934 = vld [vmem:[%s933] ss:$4 sm:$0xff]
  %v935 = vadd.f32 %v926, %v930
  %v936 = vadd.f32 %v927, %v932
  %v937 = vadd.f32 %v928, %v934
  %v938 = vld [vmem:[%s0] sm:$0xff]
  %v939 = vld [vmem:[%s0 + $0x8] sm:$0xff]
  %v940 = vld [vmem:[%s0 + $0x10] sm:$0xff]
  %v941 = vld [vmem:[%s6] sm:$0xff]
  %v942 = vld [vmem:[%s7] sm:$0xff]
  %v943 = vld [vmem:[%s7 + $0x8] sm:$0xff]
  %v945 = vsel %vm251, %v935, 0
  %v948 = vsel %vm251, %v936, 0
  %v951 = vsel %vm251, %v937, 0
  %953 = vmatprep.subr.mxu0 0.0
  %954 = vmatpush1.msra.mxu0 0.0
  %955 = vmatprep.subr.mxu0 0.0
  %956 = vmatpush1.msra.mxu0 0.0
  %957 = vmatprep.subr.mxu0 0.0
  %958 = vmatpush1.msra.mxu0 0.0
  %959 = vmatprep.subr.mxu0 0.0
  %960 = vmatpush1.msra.mxu0 0.0
  %961 = vmatprep.subr.mxu0 0.0
  %962 = vmatpush1.msra.mxu0 0.0
  %963 = vmatprep.subr.mxu0 0.0
  %964 = vmatpush1.msra.mxu0 0.0
  %965 = vmatprep.subr.mxu0 0.0
  %966 = vmatpush1.msra.mxu0 0.0
  %967 = vmatprep.subr.mxu0 0.0
  %968 = vmatpush1.msra.mxu0 0.0
  %969 = vmatprep.subr.mxu0 0.0
  %970 = vmatpush1.msra.mxu0 0.0
  %971 = vmatprep.subr.mxu0 0.0
  %972 = vmatpush1.msra.mxu0 0.0
  %973 = vmatprep.subr.mxu0 0.0
  %974 = vmatpush1.msra.mxu0 0.0
  %975 = vmatprep.subr.mxu0 0.0
  %976 = vmatpush1.msra.mxu0 0.0
  %977 = vmatprep.subr.mxu0 0.0
  %978 = vmatpush1.msra.mxu0 0.0
  %979 = vmatprep.subr.mxu0 0.0
  %980 = vmatpush1.msra.mxu0 0.0
  %981 = vmatprep.subr.mxu0 0.0
  %982 = vmatpush1.msra.mxu0 %v943
  %983 = vmatprep.subr.mxu0 0.0
  %984 = vmatpush1.msra.mxu0 %v942
  %985 = vmatprep.subr.mxu0 0.0
  %986 = vmatpush2.msra.mxu0 0.0
  %987 = vmatprep.subr.mxu0 0.0
  %988 = vmatpush2.msra.mxu0 0.0
  %989 = vmatprep.subr.mxu0 0.0
  %990 = vmatpush2.msra.mxu0 0.0
  %991 = vmatprep.subr.mxu0 0.0
  %992 = vmatpush2.msra.mxu0 0.0
  %993 = vmatprep.subr.mxu0 0.0
  %994 = vmatpush2.msra.mxu0 0.0
  %995 = vmatprep.subr.mxu0 0.0
  %996 = vmatpush2.msra.mxu0 0.0
  %997 = vmatprep.subr.mxu0 0.0
  %998 = vmatpush2.msra.mxu0 0.0
  %999 = vmatprep.subr.mxu0 0.0
  %1000 = vmatpush2.msra.mxu0 0.0
  %1001 = vmatprep.subr.mxu0 0.0
  %1002 = vmatpush2.msra.mxu0 0.0
  %1003 = vmatprep.subr.mxu0 0.0
  %1004 = vmatpush2.msra.mxu0 0.0
  %1005 = vmatprep.subr.mxu0 0.0
  %1006 = vmatpush2.msra.mxu0 0.0
  %1007 = vmatprep.subr.mxu0 0.0
  %1008 = vmatpush2.msra.mxu0 0.0
  %1009 = vmatprep.subr.mxu0 0.0
  %1010 = vmatpush2.msra.mxu0 0.0
  %1011 = vmatprep.subr.mxu0 0.0
  %1012 = vmatpush2.msra.mxu0 0.0
  %1013 = vmatprep.subr.mxu0 0.0
  %1014 = vmatpush2.msra.mxu0 0.0
  %1015 = vmatprep.subr.mxu0 0.0
  %1016 = vmatpush2.msra.mxu0 0.0
  %1017 = vmatprep.mubr.f32.mxu0 0.0
  %1018 = vmatmul.mubr.f32.gmra.mxu0 %v945
  %v1019 = vpop.f32.mrf.mxu0
  %v1020 = vadd.f32 0.0, %v1019
  %v1021 = vpop.f32.mrf.mxu0
  %1022 = vmatprep.mubr.f32.mxu0 0.0
  %1023 = vmatmul.mubr.f32.gmra.mxu0 %v948
  %v1024 = vpop.f32.mrf.mxu0
  %v1025 = vadd.f32 0.0, %v1024
  %v1026 = vpop.f32.mrf.mxu0
  %1027 = vmatprep.mubr.f32.mxu0 0.0
  %1028 = vmatmul.mubr.f32.gmra.mxu0 %v951
  %v1029 = vpop.f32.mrf.mxu0
  %v1030 = vadd.f32 0.0, %v1029
  %v1031 = vpop.f32.mrf.mxu0
  %1032 = vdwg.mxu0
  %vm1033 = vcmask 64512
  %v1035 = vsel %vm1033, %v938, 0
  %v1038 = vsel %vm1033, %v939, 0
  %v1041 = vsel %vm1033, %v940, 0
  %1043 = vmatprep.subr.mxu0 0.0
  %1044 = vmatpush1.msra.mxu0 0.0
  %1045 = vmatprep.subr.mxu0 0.0
  %1046 = vmatpush1.msra.mxu0 0.0
  %1047 = vmatprep.subr.mxu0 0.0
  %1048 = vmatpush1.msra.mxu0 0.0
  %1049 = vmatprep.subr.mxu0 0.0
  %1050 = vmatpush1.msra.mxu0 0.0
  %1051 = vmatprep.subr.mxu0 0.0
  %1052 = vmatpush1.msra.mxu0 0.0
  %1053 = vmatprep.subr.mxu0 0.0
  %1054 = vmatpush1.msra.mxu0 0.0
  %1055 = vmatprep.subr.mxu0 0.0
  %1056 = vmatpush1.msra.mxu0 0.0
  %1057 = vmatprep.subr.mxu0 0.0
  %1058 = vmatpush1.msra.mxu0 0.0
  %1059 = vmatprep.subr.mxu0 0.0
  %1060 = vmatpush1.msra.mxu0 0.0
  %1061 = vmatprep.subr.mxu0 0.0
  %1062 = vmatpush1.msra.mxu0 0.0
  %1063 = vmatprep.subr.mxu0 0.0
  %1064 = vmatpush1.msra.mxu0 0.0
  %1065 = vmatprep.subr.mxu0 0.0
  %1066 = vmatpush1.msra.mxu0 0.0
  %1067 = vmatprep.subr.mxu0 0.0
  %1068 = vmatpush1.msra.mxu0 0.0
  %1069 = vmatprep.subr.mxu0 0.0
  %1070 = vmatpush1.msra.mxu0 0.0
  %1071 = vmatprep.subr.mxu0 0.0
  %1072 = vmatpush1.msra.mxu0 0.0
  %1073 = vmatprep.subr.mxu0 0.0
  %1074 = vmatpush1.msra.mxu0 %v941
  %1075 = vmatprep.subr.mxu0 0.0
  %1076 = vmatpush2.msra.mxu0 0.0
  %1077 = vmatprep.subr.mxu0 0.0
  %1078 = vmatpush2.msra.mxu0 0.0
  %1079 = vmatprep.subr.mxu0 0.0
  %1080 = vmatpush2.msra.mxu0 0.0
  %1081 = vmatprep.subr.mxu0 0.0
  %1082 = vmatpush2.msra.mxu0 0.0
  %1083 = vmatprep.subr.mxu0 0.0
  %1084 = vmatpush2.msra.mxu0 0.0
  %1085 = vmatprep.subr.mxu0 0.0
  %1086 = vmatpush2.msra.mxu0 0.0
  %1087 = vmatprep.subr.mxu0 0.0
  %1088 = vmatpush2.msra.mxu0 0.0
  %1089 = vmatprep.subr.mxu0 0.0
  %1090 = vmatpush2.msra.mxu0 0.0
  %1091 = vmatprep.subr.mxu0 0.0
  %1092 = vmatpush2.msra.mxu0 0.0
  %1093 = vmatprep.subr.mxu0 0.0
  %1094 = vmatpush2.msra.mxu0 0.0
  %1095 = vmatprep.subr.mxu0 0.0
  %1096 = vmatpush2.msra.mxu0 0.0
  %1097 = vmatprep.subr.mxu0 0.0
  %1098 = vmatpush2.msra.mxu0 0.0
  %1099 = vmatprep.subr.mxu0 0.0
  %1100 = vmatpush2.msra.mxu0 0.0
  %1101 = vmatprep.subr.mxu0 0.0
  %1102 = vmatpush2.msra.mxu0 0.0
  %1103 = vmatprep.subr.mxu0 0.0
  %1104 = vmatpush2.msra.mxu0 0.0
  %1105 = vmatprep.subr.mxu0 0.0
  %1106 = vmatpush2.msra.mxu0 0.0
  %1107 = vmatprep.mubr.f32.mxu0 0.0
  %1108 = vmatmul.mubr.f32.gmra.mxu0 %v1035
  %v1109 = vpop.f32.mrf.mxu0
  %v1110 = vadd.f32 %v1020, %v1109
  %v1111 = vpop.f32.mrf.mxu0
  %1112 = vmatprep.mubr.f32.mxu0 0.0
  %1113 = vmatmul.mubr.f32.gmra.mxu0 %v1038
  %v1114 = vpop.f32.mrf.mxu0
  %v1115 = vadd.f32 %v1025, %v1114
  %v1116 = vpop.f32.mrf.mxu0
  %1117 = vmatprep.mubr.f32.mxu0 0.0
  %1118 = vmatmul.mubr.f32.gmra.mxu0 %v1041
  %v1119 = vpop.f32.mrf.mxu0
  %v1120 = vadd.f32 %v1030, %v1119
  %v1121 = vpop.f32.mrf.mxu0
  %1122 = vdwg.mxu0
  %v1123 = vld [vmem:[%s8] sm:$0x1]
  %v1125 = vlaneseq
  %v1126 = vshrl.u32 %v1125, 7
  %v1127 = vsub.s32 0, %v1126
  %v1128 = vrot.slane %v1123, %v1127
  %v1130 = vadd.f32 %v1110, %v1128
  %v1131 = vadd.f32 %v1115, %v1128
  %v1132 = vadd.f32 %v1120, %v1128
  %v1133 = vmax.f32 %v1130, 0.0
  %v1134 = vmax.f32 %v1131, 0.0
  %v1135 = vmax.f32 %v1132, 0.0
  %v1136 = vld [vmem:[%s9] sm:$0xff]
  %v1137 = vld [vmem:[%s9 + $0x8] sm:$0xff]
  %v1138 = vld [vmem:[%s9 + $0x10] sm:$0xff]
  %v1139 = vld [vmem:[%s9 + $0x18] sm:$0xff]
  %v1140 = vld [vmem:[%s10] sm:$0x1]
  %v1142 = vlaneseq
  %v1143 = vshrl.u32 %v1142, 7
  %v1144 = vsub.s32 0, %v1143
  %v1145 = vrot.slane %v1140, %v1144
  %vm1147 = vcmask 261120
  %v1149 = vsel %vm1147, %v1133, 0
  %v1152 = vsel %vm1147, %v1134, 0
  %v1155 = vsel %vm1147, %v1135, 0
  %1157 = vmatprep.subr.mxu0 0.0
  %1158 = vmatpush1.msra.mxu0 0.0
  %1159 = vmatprep.subr.mxu0 0.0
  %1160 = vmatpush1.msra.mxu0 0.0
  %1161 = vmatprep.subr.mxu0 0.0
  %1162 = vmatpush1.msra.mxu0 0.0
  %1163 = vmatprep.subr.mxu0 0.0
  %1164 = vmatpush1.msra.mxu0 0.0
  %1165 = vmatprep.subr.mxu0 0.0
  %1166 = vmatpush1.msra.mxu0 0.0
  %1167 = vmatprep.subr.mxu0 0.0
  %1168 = vmatpush1.msra.mxu0 0.0
  %1169 = vmatprep.subr.mxu0 0.0
  %1170 = vmatpush1.msra.mxu0 0.0
  %1171 = vmatprep.subr.mxu0 0.0
  %1172 = vmatpush1.msra.mxu0 0.0
  %1173 = vmatprep.subr.mxu0 0.0
  %1174 = vmatpush1.msra.mxu0 0.0
  %1175 = vmatprep.subr.mxu0 0.0
  %1176 = vmatpush1.msra.mxu0 0.0
  %1177 = vmatprep.subr.mxu0 0.0
  %1178 = vmatpush1.msra.mxu0 0.0
  %1179 = vmatprep.subr.mxu0 0.0
  %1180 = vmatpush1.msra.mxu0 0.0
  %1181 = vmatprep.subr.mxu0 0.0
  %1182 = vmatpush1.msra.mxu0 %v1139
  %1183 = vmatprep.subr.mxu0 0.0
  %1184 = vmatpush1.msra.mxu0 %v1138
  %1185 = vmatprep.subr.mxu0 0.0
  %1186 = vmatpush1.msra.mxu0 %v1137
  %1187 = vmatprep.subr.mxu0 0.0
  %1188 = vmatpush1.msra.mxu0 %v1136
  %1189 = vmatprep.subr.mxu0 0.0
  %1190 = vmatpush2.msra.mxu0 0.0
  %1191 = vmatprep.subr.mxu0 0.0
  %1192 = vmatpush2.msra.mxu0 0.0
  %1193 = vmatprep.subr.mxu0 0.0
  %1194 = vmatpush2.msra.mxu0 0.0
  %1195 = vmatprep.subr.mxu0 0.0
  %1196 = vmatpush2.msra.mxu0 0.0
  %1197 = vmatprep.subr.mxu0 0.0
  %1198 = vmatpush2.msra.mxu0 0.0
  %1199 = vmatprep.subr.mxu0 0.0
  %1200 = vmatpush2.msra.mxu0 0.0
  %1201 = vmatprep.subr.mxu0 0.0
  %1202 = vmatpush2.msra.mxu0 0.0
  %1203 = vmatprep.subr.mxu0 0.0
  %1204 = vmatpush2.msra.mxu0 0.0
  %1205 = vmatprep.subr.mxu0 0.0
  %1206 = vmatpush2.msra.mxu0 0.0
  %1207 = vmatprep.subr.mxu0 0.0
  %1208 = vmatpush2.msra.mxu0 0.0
  %1209 = vmatprep.subr.mxu0 0.0
  %1210 = vmatpush2.msra.mxu0 0.0
  %1211 = vmatprep.subr.mxu0 0.0
  %1212 = vmatpush2.msra.mxu0 0.0
  %1213 = vmatprep.subr.mxu0 0.0
  %1214 = vmatpush2.msra.mxu0 0.0
  %1215 = vmatprep.subr.mxu0 0.0
  %1216 = vmatpush2.msra.mxu0 0.0
  %1217 = vmatprep.subr.mxu0 0.0
  %1218 = vmatpush2.msra.mxu0 0.0
  %1219 = vmatprep.subr.mxu0 0.0
  %1220 = vmatpush2.msra.mxu0 0.0
  %1221 = vmatprep.mubr.f32.mxu0 0.0
  %1222 = vmatmul.mubr.f32.gmra.mxu0 %v1149
  %v1223 = vpop.f32.mrf.mxu0
  %v1224 = vadd.f32 %v1145, %v1223
  %v1225 = vpop.f32.mrf.mxu0
  %1226 = vmatprep.mubr.f32.mxu0 0.0
  %1227 = vmatmul.mubr.f32.gmra.mxu0 %v1152
  %v1228 = vpop.f32.mrf.mxu0
  %v1229 = vadd.f32 %v1145, %v1228
  %v1230 = vpop.f32.mrf.mxu0
  %1231 = vmatprep.mubr.f32.mxu0 0.0
  %1232 = vmatmul.mubr.f32.gmra.mxu0 %v1155
  %v1233 = vpop.f32.mrf.mxu0
  %v1234 = vadd.f32 %v1145, %v1233
  %v1235 = vpop.f32.mrf.mxu0
  %1236 = vdwg.mxu0
  %v1237 = vmax.f32 %v1224, 0.0
  %v1238 = vmax.f32 %v1229, 0.0
  %v1239 = vmax.f32 %v1234, 0.0
  %v1240 = vld [vmem:[%s11] sm:$0xff]
  %v1241 = vld [vmem:[%s11 + $0x8] sm:$0xff]
  %v1242 = vld [vmem:[%s11 + $0x10] sm:$0xff]
  %v1243 = vld [vmem:[%s11 + $0x18] sm:$0xff]
  %v1244 = vld [vmem:[%s12] sm:$0x1]
  %v1246 = vlaneseq
  %v1247 = vshrl.u32 %v1246, 7
  %v1248 = vsub.s32 0, %v1247
  %v1249 = vrot.slane %v1244, %v1248
  %v1252 = vsel %vm1147, %v1237, 0
  %v1255 = vsel %vm1147, %v1238, 0
  %v1258 = vsel %vm1147, %v1239, 0
  %1260 = vmatprep.subr.mxu0 0.0
  %1261 = vmatpush1.msra.mxu0 0.0
  %1262 = vmatprep.subr.mxu0 0.0
  %1263 = vmatpush1.msra.mxu0 0.0
  %1264 = vmatprep.subr.mxu0 0.0
  %1265 = vmatpush1.msra.mxu0 0.0
  %1266 = vmatprep.subr.mxu0 0.0
  %1267 = vmatpush1.msra.mxu0 0.0
  %1268 = vmatprep.subr.mxu0 0.0
  %1269 = vmatpush1.msra.mxu0 0.0
  %1270 = vmatprep.subr.mxu0 0.0
  %1271 = vmatpush1.msra.mxu0 0.0
  %1272 = vmatprep.subr.mxu0 0.0
  %1273 = vmatpush1.msra.mxu0 0.0
  %1274 = vmatprep.subr.mxu0 0.0
  %1275 = vmatpush1.msra.mxu0 0.0
  %1276 = vmatprep.subr.mxu0 0.0
  %1277 = vmatpush1.msra.mxu0 0.0
  %1278 = vmatprep.subr.mxu0 0.0
  %1279 = vmatpush1.msra.mxu0 0.0
  %1280 = vmatprep.subr.mxu0 0.0
  %1281 = vmatpush1.msra.mxu0 0.0
  %1282 = vmatprep.subr.mxu0 0.0
  %1283 = vmatpush1.msra.mxu0 0.0
  %1284 = vmatprep.subr.mxu0 0.0
  %1285 = vmatpush1.msra.mxu0 %v1243
  %1286 = vmatprep.subr.mxu0 0.0
  %1287 = vmatpush1.msra.mxu0 %v1242
  %1288 = vmatprep.subr.mxu0 0.0
  %1289 = vmatpush1.msra.mxu0 %v1241
  %1290 = vmatprep.subr.mxu0 0.0
  %1291 = vmatpush1.msra.mxu0 %v1240
  %1292 = vmatprep.subr.mxu0 0.0
  %1293 = vmatpush2.msra.mxu0 0.0
  %1294 = vmatprep.subr.mxu0 0.0
  %1295 = vmatpush2.msra.mxu0 0.0
  %1296 = vmatprep.subr.mxu0 0.0
  %1297 = vmatpush2.msra.mxu0 0.0
  %1298 = vmatprep.subr.mxu0 0.0
  %1299 = vmatpush2.msra.mxu0 0.0
  %1300 = vmatprep.subr.mxu0 0.0
  %1301 = vmatpush2.msra.mxu0 0.0
  %1302 = vmatprep.subr.mxu0 0.0
  %1303 = vmatpush2.msra.mxu0 0.0
  %1304 = vmatprep.subr.mxu0 0.0
  %1305 = vmatpush2.msra.mxu0 0.0
  %1306 = vmatprep.subr.mxu0 0.0
  %1307 = vmatpush2.msra.mxu0 0.0
  %1308 = vmatprep.subr.mxu0 0.0
  %1309 = vmatpush2.msra.mxu0 0.0
  %1310 = vmatprep.subr.mxu0 0.0
  %1311 = vmatpush2.msra.mxu0 0.0
  %1312 = vmatprep.subr.mxu0 0.0
  %1313 = vmatpush2.msra.mxu0 0.0
  %1314 = vmatprep.subr.mxu0 0.0
  %1315 = vmatpush2.msra.mxu0 0.0
  %1316 = vmatprep.subr.mxu0 0.0
  %1317 = vmatpush2.msra.mxu0 0.0
  %1318 = vmatprep.subr.mxu0 0.0
  %1319 = vmatpush2.msra.mxu0 0.0
  %1320 = vmatprep.subr.mxu0 0.0
  %1321 = vmatpush2.msra.mxu0 0.0
  %1322 = vmatprep.subr.mxu0 0.0
  %1323 = vmatpush2.msra.mxu0 0.0
  %1324 = vmatprep.mubr.f32.mxu0 0.0
  %1325 = vmatmul.mubr.f32.gmra.mxu0 %v1252
  %v1326 = vpop.f32.mrf.mxu0
  %v1327 = vadd.f32 %v1249, %v1326
  %v1328 = vpop.f32.mrf.mxu0
  %1329 = vmatprep.mubr.f32.mxu0 0.0
  %1330 = vmatmul.mubr.f32.gmra.mxu0 %v1255
  %v1331 = vpop.f32.mrf.mxu0
  %v1332 = vadd.f32 %v1249, %v1331
  %v1333 = vpop.f32.mrf.mxu0
  %1334 = vmatprep.mubr.f32.mxu0 0.0
  %1335 = vmatmul.mubr.f32.gmra.mxu0 %v1258
  %v1336 = vpop.f32.mrf.mxu0
  %v1337 = vadd.f32 %v1249, %v1336
  %v1338 = vpop.f32.mrf.mxu0
  %1339 = vdwg.mxu0
  %1340 = vst.msk [vmem:[%s13] sm:$0xff] %vm251, %v1327
  %1341 = vst.msk [vmem:[%s13 + $0x8] sm:$0xff] %vm251, %v1332
  %1342 = vst.msk [vmem:[%s13 + $0x10] sm:$0xff] %vm251, %v1337
  %1355 = vrot.lane.b32.xlu0 %v355, 112
  %v1356 = vpop.permute.xlu0 %1355
  %1357 = vrot.lane.b32.xlu0 %v360, 112
  %v1358 = vpop.permute.xlu0 %1357
  %1359 = vrot.lane.b32.xlu0 %v365, 112
  %v1360 = vpop.permute.xlu0 %1359
  %1361 = vrot.lane.b32.xlu0 %v370, 112
  %v1362 = vpop.permute.xlu0 %1361
  %1363 = vrot.lane.b32.xlu0 %v375, 112
  %v1364 = vpop.permute.xlu0 %1363
  %1365 = vrot.lane.b32.xlu0 %v380, 112
  %v1366 = vpop.permute.xlu0 %1365
  %1367 = vrot.lane.b32.xlu0 %v385, 112
  %v1368 = vpop.permute.xlu0 %1367
  %1369 = vrot.lane.b32.xlu0 %v390, 112
  %v1370 = vpop.permute.xlu0 %1369
  %1371 = vrot.lane.b32.xlu0 %v395, 112
  %v1372 = vpop.permute.xlu0 %1371
  %1373 = vrot.lane.b32.xlu0 %v400, 112
  %v1374 = vpop.permute.xlu0 %1373
  %1375 = vrot.lane.b32.xlu0 %v405, 112
  %v1376 = vpop.permute.xlu0 %1375
  %1377 = vrot.lane.b32.xlu0 %v410, 112
  %v1378 = vpop.permute.xlu0 %1377
  %vm1391 = vcmask 7168
  %1392 = vst.msk [vmem:[%s14] sm:$0xff] %vm1391, %v1356
  %1393 = vst.msk [vmem:[%s14 + $0x8] sm:$0xff] %vm1391, %v1358
  %1394 = vst.msk [vmem:[%s14 + $0x10] sm:$0xff] %vm1391, %v1360
  %1395 = vst.msk [vmem:[%s14 + $0x18] sm:$0xff] %vm1391, %v1362
  %1396 = vst.msk [vmem:[%s14 + $0x20] sm:$0xff] %vm1391, %v1364
  %1397 = vst.msk [vmem:[%s14 + $0x28] sm:$0xff] %vm1391, %v1366
  %1398 = vst.msk [vmem:[%s14 + $0x30] sm:$0xff] %vm1391, %v1368
  %1399 = vst.msk [vmem:[%s14 + $0x38] sm:$0xff] %vm1391, %v1370
  %1400 = vst.msk [vmem:[%s14 + $0x40] sm:$0xff] %vm1391, %v1372
  %1401 = vst.msk [vmem:[%s14 + $0x48] sm:$0xff] %vm1391, %v1374
  %1402 = vst.msk [vmem:[%s14 + $0x50] sm:$0xff] %vm1391, %v1376
  %1403 = vst.msk [vmem:[%s14 + $0x58] sm:$0xff] %vm1391, %v1378
  // Predicated region
  $region54: #{tpu_custom_call.1} parent=0 // pred_check
    _
  $region55: #{tpu_custom_call.1} parent=0 // pred_check_branch
    %1405 = sbr.rel (0) target = $region57
  $region56: #{tpu_custom_call.1} parent=0 // pred_region
    _
  $region57: #{tpu_custom_call.1} parent=0 // pred_fallthru
    _
  // Predicated region
  $region58: #{tpu_custom_call.1} parent=0 // pred_check
    _
  $region59: #{tpu_custom_call.1} parent=0 // pred_check_branch
    %1407 = sbr.rel (0) target = $region61
  $region60: #{tpu_custom_call.1} parent=0 // pred_region
    _
  $region61: #{tpu_custom_call.1} parent=0 // pred_fallthru
    _
  // Predicated region
  $region62: #{tpu_custom_call.1} parent=0 // pred_check
    _
  $region63: #{tpu_custom_call.1} parent=0 // pred_check_branch
    %1409 = sbr.rel (0) target = $region65
  $region64: #{tpu_custom_call.1} parent=0 // pred_region
    _
  $region65: #{tpu_custom_call.1} parent=0 // pred_fallthru
    _
  // Predicated region
  $region66: #{tpu_custom_call.1} parent=0 // pred_check
    _
  $region67: #{tpu_custom_call.1} parent=0 // pred_check_branch
    %1411 = sbr.rel (0) target = $region69
  $region68: #{tpu_custom_call.1} parent=0 // pred_region
    _
  $region69: #{tpu_custom_call.1} parent=0 // pred_fallthru
    _

</llo_original>
